<compile_context>
chip_gen: v7x
topology: tpu7x:2x2x1
jax: 0.10.0
libtpu: 0.0.40
codegen_flags: <defaults>
</compile_context>

<pallas_src>
import jax
import jax.numpy as jnp
from jax import lax
from jax.experimental import pallas as pl
from jax.experimental.pallas import tpu as pltpu

K = 3          # Conv3d kernel size (3x3x3), stride 1, padding 1
LANES = 128    # TPU lane width


def _fused_matmul_bn_relu_kernel(p_ref, w_ref, scale_ref, shift_ref, o_ref):
    """One (batch, row-tile) block: single MXU matmul + f32 BN/ReLU epilogue.

    p_ref     : (1, TM, 27*Cin)  im2col patch rows (compute dtype, e.g. bf16)
    w_ref     : (27*Cin, Cpad)   flattened filter taps, Cout padded to 128*k
    scale_ref : (1, Cpad)        fused BN scale (f32)
    shift_ref : (1, Cpad)        fused BN shift incl. conv bias (f32)
    o_ref     : (1, TM, Cpad)    lane-dense output tile
    """
    acc = jnp.dot(p_ref[0], w_ref[...], preferred_element_type=jnp.float32)
    y = acc * scale_ref[...] + shift_ref[...]          # f32 epilogue
    o_ref[0] = jnp.maximum(y, 0.0).astype(o_ref.dtype)


def _pick_row_tile(rows, max_tile=256):
    """Largest row tile (multiple of 16, <= max_tile) dividing rows."""
    for t in (max_tile, 128, 64, 32, 16):
        if t <= rows and rows % t == 0:
            return t
    return rows  # full extent is always a legal block


def conv_bn_relu_layer(x, w, scale, shift, *, compute_dtype=jnp.bfloat16,
                       out_dtype=None, max_row_tile=256):
    """x: (N,D,H,W,Cin); w: (3,3,3,Cin,Cout); scale/shift: (Cout,) f32."""
    if out_dtype is None:
        out_dtype = x.dtype
    N, D, H, W, Cin = x.shape
    Cout = w.shape[-1]
    rows = D * H * W
    kdim = K * K * K * Cin
    cpad = ((Cout + LANES - 1) // LANES) * LANES

    # --- wrapper-side im2col: (N, D*H*W, 27*Cin), contraction/lane dense ---
    xc = x.astype(compute_dtype)
    x_pad = jnp.pad(xc, ((0, 0), (1, 1), (1, 1), (1, 1), (0, 0)))
    taps = [x_pad[:, kd:kd + D, kh:kh + H, kw:kw + W, :]
            for kd in range(K) for kh in range(K) for kw in range(K)]
    patches = jnp.concatenate(taps, axis=-1).reshape(N, rows, kdim)

    # --- weights / fused BN params, Cout zero-padded to 128-lane multiple ---
    w2 = w.reshape(kdim, Cout).astype(compute_dtype)
    w2 = jnp.pad(w2, ((0, 0), (0, cpad - Cout)))
    scale2 = jnp.pad(scale.astype(jnp.float32), (0, cpad - Cout)).reshape(1, cpad)
    shift2 = jnp.pad(shift.astype(jnp.float32), (0, cpad - Cout)).reshape(1, cpad)

    tm = _pick_row_tile(rows, max_row_tile)
    grid = (N, rows // tm)

    out = pl.pallas_call(
        _fused_matmul_bn_relu_kernel,
        out_shape=jax.ShapeDtypeStruct((N, rows, cpad), out_dtype),
        grid_spec=pltpu.PrefetchScalarGridSpec(
            num_scalar_prefetch=0,
            grid=grid,
            in_specs=[
                pl.BlockSpec((1, tm, kdim), lambda n, m: (n, m, 0)),
                pl.BlockSpec((kdim, cpad), lambda n, m: (0, 0)),
                pl.BlockSpec((1, cpad), lambda n, m: (0, 0)),
                pl.BlockSpec((1, cpad), lambda n, m: (0, 0)),
            ],
            out_specs=pl.BlockSpec((1, tm, cpad), lambda n, m: (n, m, 0)),
        ),
        compiler_params=pltpu.CompilerParams(
            dimension_semantics=("parallel", "parallel"),
            vmem_limit_bytes=48 * 1024 * 1024,
        ),
    )(patches, w2, scale2, shift2)

    # Slice off the Cout padding and restore (N, D, H, W, Cout) in the wrapper.
    return out[:, :, :Cout].reshape(N, D, H, W, Cout)


def conv_block_3d(x, params1, params2, compute_dtype=jnp.bfloat16):
    """ConvBlock3d.forward: two fused conv+BN+ReLU layers.

    The inter-layer activation stays in the compute dtype (bf16) to halve HBM
    traffic; the final output matches the input dtype.
    """
    h = conv_bn_relu_layer(x, *params1, compute_dtype=compute_dtype,
                           out_dtype=compute_dtype)
    y = conv_bn_relu_layer(h, *params2, compute_dtype=compute_dtype,
                           out_dtype=x.dtype)
    return y


def init_layer_params(key, in_ch, out_ch):
    """Deterministic synthetic params: Conv3d weight/bias + eval-mode BN,
    folded into (weight, scale, shift)."""
    ks = jax.random.split(key, 6)
    fan_in = in_ch * K ** 3
    bound = 1.0 / (fan_in ** 0.5)
    w = jax.random.uniform(ks[0], (K, K, K, in_ch, out_ch), jnp.float32,
                           -bound, bound)
    b = jax.random.uniform(ks[1], (out_ch,), jnp.float32, -bound, bound)
    gamma = 1.0 + 0.1 * jax.random.normal(ks[2], (out_ch,), jnp.float32)
    beta = 0.1 * jax.random.normal(ks[3], (out_ch,), jnp.float32)
    run_mean = 0.1 * jax.random.normal(ks[4], (out_ch,), jnp.float32)
    run_var = jnp.abs(1.0 + 0.1 * jax.random.normal(ks[5], (out_ch,),
                                                    jnp.float32))
    eps = 1e-5
    scale = gamma / jnp.sqrt(run_var + eps)
    shift = (b - run_mean) * scale + beta
    return w, scale, shift


def _ref_conv(x, w):
    return lax.conv_general_dilated(
        x, w, window_strides=(1, 1, 1), padding="SAME",
        dimension_numbers=("NDHWC", "DHWIO", "NDHWC"),
        precision=lax.Precision.HIGHEST)


def ref_layer_bf16(x, w, scale, shift, compute_dtype=jnp.bfloat16):
    """Reference with the same bf16 operand rounding the kernel uses
    (f32 accumulation + f32 epilogue) — isolates kernel correctness."""
    xr = x.astype(compute_dtype).astype(jnp.float32)
    wr = w.astype(compute_dtype).astype(jnp.float32)
    y = _ref_conv(xr, wr)
    return jnp.maximum(y * scale + shift, 0.0)


def ref_layer_f32(x, w, scale, shift):
    """Exact f32 module semantics (Conv3d + eval BN + ReLU)."""
    y = _ref_conv(x, w)
    return jnp.maximum(y * scale + shift, 0.0)


if __name__ == "__main__":
    # Small shapes consistent with the module: batch=2, in_ch=4, out_ch=8,
    # spatial D=H=W=8.  (NCDHW equivalent: (2, 4, 8, 8, 8).)
    N, D, H, W = 2, 8, 8, 8
    in_ch, out_ch = 4, 8

    root = jax.random.PRNGKey(0)
    kx, k1, k2 = jax.random.split(root, 3)
    x = jax.random.normal(kx, (N, D, H, W, in_ch), jnp.float32)

    params1 = init_layer_params(k1, in_ch, out_ch)
    params2 = init_layer_params(k2, out_ch, out_ch)

    fwd = jax.jit(conv_block_3d)
    out = jax.block_until_ready(fwd(x, params1, params2))

    assert out.shape == (N, D, H, W, out_ch)
    assert out.dtype == x.dtype

    # Check 1: against a reference with identical bf16 operand rounding
    # (kernel structure / indexing correctness).
    ref_b = ref_layer_bf16(ref_layer_bf16(x, *params1), *params2)
    assert jnp.allclose(out, ref_b, rtol=1e-2, atol=1e-2), \
        "mismatch vs bf16-operand reference"

    # Check 2: against the exact f32 module semantics (bounded bf16
    # quantization error only).
    ref_f = ref_layer_f32(ref_layer_f32(x, *params1), *params2)
    assert jnp.allclose(out, ref_f, rtol=5e-2, atol=5e-2), \
        "mismatch vs f32 reference"

    print("KERNEL_OK")
</pallas_src>

<mosaic_0001>
module attributes {stable_mosaic.version = 11 : i64} {
  func.func @_fused_matmul_bn_relu_kernel(%arg0: i32, %arg1: i32, %arg2: memref<1x256x108xbf16, #tpu.memory_space<vmem>>, %arg3: memref<108x128xbf16, #tpu.memory_space<vmem>>, %arg4: memref<1x128xf32, #tpu.memory_space<vmem>>, %arg5: memref<1x128xf32, #tpu.memory_space<vmem>>, %arg6: memref<1x256x128xbf16, #tpu.memory_space<vmem>>) attributes {dimension_semantics = [#tpu.dimension_semantics<parallel>, #tpu.dimension_semantics<parallel>], iteration_bounds = array<i64: 2, 2>, scalar_prefetch = 0 : i64, scratch_operands = 0 : i64, tpu.core_type = #tpu.core_type<tc>, window_params = [{transform_indices = @transform_0, window_bounds = array<i64: 1, 256, 108>}, {pipeline_mode = #tpu.pipeline_mode<synchronous>, transform_indices = @transform_1, window_bounds = array<i64: 108, 128>}, {pipeline_mode = #tpu.pipeline_mode<synchronous>, transform_indices = @transform_2, window_bounds = array<i64: 1, 128>}, {pipeline_mode = #tpu.pipeline_mode<synchronous>, transform_indices = @transform_3, window_bounds = array<i64: 1, 128>}, {transform_indices = @transform_4, window_bounds = array<i64: 1, 256, 128>}]} {
    %c0 = arith.constant 0 : index
    %c0_0 = arith.constant 0 : index
    %c0_1 = arith.constant 0 : index
    %0 = vector.load %arg2[%c0, %c0_0, %c0_1] : memref<1x256x108xbf16, #tpu.memory_space<vmem>>, vector<1x256x108xbf16>
    %1 = vector.shape_cast %0 : vector<1x256x108xbf16> to vector<256x108xbf16>
    %c0_2 = arith.constant 0 : index
    %c0_3 = arith.constant 0 : index
    %2 = vector.load %arg3[%c0_2, %c0_3] : memref<108x128xbf16, #tpu.memory_space<vmem>>, vector<108x128xbf16>
    %cst = arith.constant dense<0.000000e+00> : vector<256x128xf32>
    %3 = tpu.matmul %1, %2, %cst {dimension_numbers = #tpu.dot_dimension_numbers<[1], [0], [0], [1], [0, 0, 1, 1], [], []>} : vector<256x108xbf16>, vector<108x128xbf16>, vector<256x128xf32> -> vector<256x128xf32>
    %c0_4 = arith.constant 0 : index
    %c0_5 = arith.constant 0 : index
    %4 = vector.load %arg4[%c0_4, %c0_5] : memref<1x128xf32, #tpu.memory_space<vmem>>, vector<1x128xf32>
    %5 = vector.broadcast %4 : vector<1x128xf32> to vector<256x128xf32>
    %6 = arith.mulf %3, %5 : vector<256x128xf32>
    %c0_6 = arith.constant 0 : index
    %c0_7 = arith.constant 0 : index
    %7 = vector.load %arg5[%c0_6, %c0_7] : memref<1x128xf32, #tpu.memory_space<vmem>>, vector<1x128xf32>
    %8 = vector.broadcast %7 : vector<1x128xf32> to vector<256x128xf32>
    %9 = arith.addf %6, %8 : vector<256x128xf32>
    %cst_8 = arith.constant 0.000000e+00 : f32
    %10 = vector.broadcast %cst_8 : f32 to vector<256x128xf32>
    %11 = arith.maximumf %9, %10 : vector<256x128xf32>
    %12 = arith.truncf %11 : vector<256x128xf32> to vector<256x128xbf16>
    %c0_9 = arith.constant 0 : index
    %c0_10 = arith.constant 0 : index
    %c0_11 = arith.constant 0 : index
    %13 = vector.load %arg6[%c0_9, %c0_10, %c0_11] : memref<1x256x128xbf16, #tpu.memory_space<vmem>>, vector<1x256x128xbf16>
    %14 = vector.shape_cast %13 : vector<1x256x128xbf16> to vector<256x128xbf16>
    %15 = vector.shape_cast %12 : vector<256x128xbf16> to vector<1x256x128xbf16>
    tpu.vector_store %arg6[%c0_9, %c0_10, %c0_11], %15 {strides = array<i32>} : memref<1x256x128xbf16, #tpu.memory_space<vmem>>, vector<1x256x128xbf16>,
    return
  }
  func.func @transform_0(%arg0: i32, %arg1: i32) -> (i32, i32, i32) {
    %c0_i32 = arith.constant 0 : i32
    %c0_i32_0 = arith.constant 0 : i32
    return %arg0, %arg1, %c0_i32 : i32, i32, i32
  }
  func.func @transform_1(%arg0: i32, %arg1: i32) -> (i32, i32) {
    %c0_i32 = arith.constant 0 : i32
    %c0_i32_0 = arith.constant 0 : i32
    %c0_i32_1 = arith.constant 0 : i32
    return %c0_i32, %c0_i32_0 : i32, i32
  }
  func.func @transform_2(%arg0: i32, %arg1: i32) -> (i32, i32) {
    %c0_i32 = arith.constant 0 : i32
    %c0_i32_0 = arith.constant 0 : i32
    %c0_i32_1 = arith.constant 0 : i32
    return %c0_i32, %c0_i32_0 : i32, i32
  }
  func.func @transform_3(%arg0: i32, %arg1: i32) -> (i32, i32) {
    %c0_i32 = arith.constant 0 : i32
    %c0_i32_0 = arith.constant 0 : i32
    %c0_i32_1 = arith.constant 0 : i32
    return %c0_i32, %c0_i32_0 : i32, i32
  }
  func.func @transform_4(%arg0: i32, %arg1: i32) -> (i32, i32, i32) {
    %c0_i32 = arith.constant 0 : i32
    %c0_i32_0 = arith.constant 0 : i32
    return %arg0, %arg1, %c0_i32 : i32, i32, i32
  }
}

module attributes {stable_mosaic.version = 11 : i64} {
  func.func @_fused_matmul_bn_relu_kernel(%arg0: i32, %arg1: i32, %arg2: memref<1x256x216xbf16, #tpu.memory_space<vmem>>, %arg3: memref<216x128xbf16, #tpu.memory_space<vmem>>, %arg4: memref<1x128xf32, #tpu.memory_space<vmem>>, %arg5: memref<1x128xf32, #tpu.memory_space<vmem>>, %arg6: memref<1x256x128xf32, #tpu.memory_space<vmem>>) attributes {dimension_semantics = [#tpu.dimension_semantics<parallel>, #tpu.dimension_semantics<parallel>], iteration_bounds = array<i64: 2, 2>, scalar_prefetch = 0 : i64, scratch_operands = 0 : i64, tpu.core_type = #tpu.core_type<tc>, window_params = [{transform_indices = @transform_0, window_bounds = array<i64: 1, 256, 216>}, {pipeline_mode = #tpu.pipeline_mode<synchronous>, transform_indices = @transform_1, window_bounds = array<i64: 216, 128>}, {pipeline_mode = #tpu.pipeline_mode<synchronous>, transform_indices = @transform_2, window_bounds = array<i64: 1, 128>}, {pipeline_mode = #tpu.pipeline_mode<synchronous>, transform_indices = @transform_3, window_bounds = array<i64: 1, 128>}, {transform_indices = @transform_4, window_bounds = array<i64: 1, 256, 128>}]} {
    %c0 = arith.constant 0 : index
    %c0_0 = arith.constant 0 : index
    %c0_1 = arith.constant 0 : index
    %0 = vector.load %arg2[%c0, %c0_0, %c0_1] : memref<1x256x216xbf16, #tpu.memory_space<vmem>>, vector<1x256x216xbf16>
    %1 = vector.shape_cast %0 : vector<1x256x216xbf16> to vector<256x216xbf16>
    %c0_2 = arith.constant 0 : index
    %c0_3 = arith.constant 0 : index
    %2 = vector.load %arg3[%c0_2, %c0_3] : memref<216x128xbf16, #tpu.memory_space<vmem>>, vector<216x128xbf16>
    %cst = arith.constant dense<0.000000e+00> : vector<256x128xf32>
    %3 = tpu.matmul %1, %2, %cst {dimension_numbers = #tpu.dot_dimension_numbers<[1], [0], [0], [1], [0, 0, 1, 1], [], []>} : vector<256x216xbf16>, vector<216x128xbf16>, vector<256x128xf32> -> vector<256x128xf32>
    %c0_4 = arith.constant 0 : index
    %c0_5 = arith.constant 0 : index
    %4 = vector.load %arg4[%c0_4, %c0_5] : memref<1x128xf32, #tpu.memory_space<vmem>>, vector<1x128xf32>
    %5 = vector.broadcast %4 : vector<1x128xf32> to vector<256x128xf32>
    %6 = arith.mulf %3, %5 : vector<256x128xf32>
    %c0_6 = arith.constant 0 : index
    %c0_7 = arith.constant 0 : index
    %7 = vector.load %arg5[%c0_6, %c0_7] : memref<1x128xf32, #tpu.memory_space<vmem>>, vector<1x128xf32>
    %8 = vector.broadcast %7 : vector<1x128xf32> to vector<256x128xf32>
    %9 = arith.addf %6, %8 : vector<256x128xf32>
    %cst_8 = arith.constant 0.000000e+00 : f32
    %10 = vector.broadcast %cst_8 : f32 to vector<256x128xf32>
    %11 = arith.maximumf %9, %10 : vector<256x128xf32>
    %c0_9 = arith.constant 0 : index
    %c0_10 = arith.constant 0 : index
    %c0_11 = arith.constant 0 : index
    %12 = vector.load %arg6[%c0_9, %c0_10, %c0_11] : memref<1x256x128xf32, #tpu.memory_space<vmem>>, vector<1x256x128xf32>
    %13 = vector.shape_cast %12 : vector<1x256x128xf32> to vector<256x128xf32>
    %14 = vector.shape_cast %11 : vector<256x128xf32> to vector<1x256x128xf32>
    tpu.vector_store %arg6[%c0_9, %c0_10, %c0_11], %14 {strides = array<i32>} : memref<1x256x128xf32, #tpu.memory_space<vmem>>, vector<1x256x128xf32>,
    return
  }
  func.func @transform_0(%arg0: i32, %arg1: i32) -> (i32, i32, i32) {
    %c0_i32 = arith.constant 0 : i32
    %c0_i32_0 = arith.constant 0 : i32
    return %arg0, %arg1, %c0_i32 : i32, i32, i32
  }
  func.func @transform_1(%arg0: i32, %arg1: i32) -> (i32, i32) {
    %c0_i32 = arith.constant 0 : i32
    %c0_i32_0 = arith.constant 0 : i32
    %c0_i32_1 = arith.constant 0 : i32
    return %c0_i32, %c0_i32_0 : i32, i32
  }
  func.func @transform_2(%arg0: i32, %arg1: i32) -> (i32, i32) {
    %c0_i32 = arith.constant 0 : i32
    %c0_i32_0 = arith.constant 0 : i32
    %c0_i32_1 = arith.constant 0 : i32
    return %c0_i32, %c0_i32_0 : i32, i32
  }
  func.func @transform_3(%arg0: i32, %arg1: i32) -> (i32, i32) {
    %c0_i32 = arith.constant 0 : i32
    %c0_i32_0 = arith.constant 0 : i32
    %c0_i32_1 = arith.constant 0 : i32
    return %c0_i32, %c0_i32_0 : i32, i32
  }
  func.func @transform_4(%arg0: i32, %arg1: i32) -> (i32, i32, i32) {
    %c0_i32 = arith.constant 0 : i32
    %c0_i32_0 = arith.constant 0 : i32
    return %arg0, %arg1, %c0_i32 : i32, i32, i32
  }
}

</mosaic_0001>

<llo_original>
// kernel: conv_block_3d.2
$region0: #{conv_block_3d.2}
  #allocation0 [shape = 'u32[]', space=smem, size = 0x4, offset = 0x4, fixed_abs, tag = 'smem constant byte address 0x4 - core index']
  #allocation1 [shape = 'u32[144,128]{1,0:T(1,128)}', space=vmem, size = 0x12000, scoped, tag = 'internal scratch']
  %s0 = inlined_call_operand.vmem [shape: bf16[2,512,108], index: 0, kind: input, shape index: {}]
  %s1 = inlined_call_operand.vmem [shape: bf16[108,128], index: 1, kind: input, shape index: {}]
  %s2 = inlined_call_operand.vmem [shape: f32[1,128], index: 2, kind: input, shape index: {}]
  %s3 = inlined_call_operand.vmem [shape: f32[1,128], index: 3, kind: input, shape index: {}]
  %s4 = inlined_call_operand.vmem [shape: bf16[2,512,128], index: 4, kind: output, shape index: {}]
  %s5 = sld [smem:[#allocation0]]
  $region49: #{conv_block_3d.2} parent=0
    _
  %s7 = ssub.s32 1, %s5
  %s8 = scalar_select 0, %s7, %s5
  loop: start=0, step=1, limit=6
  $region2: #{conv_block_3d.2} parent=0 // loop_pre_header
    _
  $region3: #{conv_block_3d.2} parent=0 // loop_header
    %s10 = sphi 0, %s14
    %p11 = scmp.ge.s32.totalorder %s10, 6
    %s17 = sphi 0, %s29
    %s18 = sphi 0, %s25
    %s19 = sphi 0, %s17
    %s20 = sphi 0, %s18
    %s21 = sphi 0, %s19
    %s22 = sphi 0, %s20
    %s34 = sphi 0, %s36
    %s37 = sphi 0, %s34
    %s38 = sphi 0, %s37
    %s54 = sphi 0, %s38
    %s58 = sphi 0, %s58
    %s60 = sphi 0, %s58
    %s61 = sphi 0, %s60
    %s75 = sphi 0, %s61
    %s79 = sphi 0, %s79
    %s81 = sphi 0, %s79
    %s82 = sphi 0, %s81
    %s96 = sphi 0, %s82
    %s100 = sphi 0, %s100
    %s102 = sphi 0, %s100
    %s103 = sphi 0, %s102
    %s117 = sphi 0, %s103
    %s125 = sphi 0, %s127
    %s128 = sphi 0, %s125
    %s129 = sphi 0, %s128
    %s145 = sphi 0, %s129
  $region4: #{conv_block_3d.2} parent=0 // loop_header_branch
    %13 = sbr.rel (%p11) target = $region8
  $region5: #{conv_block_3d.2} parent=0 // loop_body
    %s15 = ssub.s32 %s10, 1
    %s16 = ssub.s32 %s10, 2
    %s23 = sadd.s32 1, %s18
    %p24 = scmp.ge.s32.totalorder %s23, 2
    %s25 = scalar_select %p24, 0, %s23
    %s26 = sadd.s32 1, %s17
    %s27 = scalar_select %p24, %s26, %s17
    %p28 = scmp.ge.s32.totalorder %s27, 2
    %s29 = scalar_select %p28, 0, %s27
    %s30 = ssub.s32 %s17, %s29
    %s31 = ssub.s32 %s18, %s25
    %s32 = sor.u32 %s30, %s31
    %p33 = scmp.eq.s32.totalorder %s32, 0
    %s35 = sadd.s32 %s34, 1
    %s36 = scalar_select %p33, %s34, %s35
    %p39 = pneg %p33
    %p40 = scmp.eq.s32.totalorder %s10, 3
    %p41 = por %p39, %p40
    %p42 = scmp.ne.s32.totalorder %s34, %s37
    %p43 = scmp.eq.s32.totalorder %s10, 0
    %p44 = por %p42, %p43
    %p45 = scmp.ne.s32.totalorder %s34, %s37
    %p46 = scmp.eq.s32.totalorder %s15, 3
    %p47 = por %p45, %p46
    %p48 = scmp.ne.s32.totalorder %s37, %s38
    %p49 = scmp.eq.s32.totalorder %s15, 0
    %p50 = por %p48, %p49
    %p51 = scmp.ne.s32.totalorder %s37, %s38
    %p52 = scmp.eq.s32.totalorder %s16, 3
    %p53 = por %p51, %p52
    %p55 = scmp.ne.s32.totalorder %s38, %s54
    %p56 = scmp.eq.s32.totalorder %s16, 0
    %p57 = por %p55, %p56
    %s59 = sadd.s32 %s58, 1
    %p62 = scmp.eq.s32.totalorder %s10, 3
    %p63 = scmp.ne.s32.totalorder %s58, %s60
    %p64 = scmp.eq.s32.totalorder %s10, 0
    %p65 = por %p63, %p64
    %p66 = scmp.ne.s32.totalorder %s58, %s60
    %p67 = scmp.eq.s32.totalorder %s15, 3
    %p68 = por %p66, %p67
    %p69 = scmp.ne.s32.totalorder %s60, %s61
    %p70 = scmp.eq.s32.totalorder %s15, 0
    %p71 = por %p69, %p70
    %p72 = scmp.ne.s32.totalorder %s60, %s61
    %p73 = scmp.eq.s32.totalorder %s16, 3
    %p74 = por %p72, %p73
    %p76 = scmp.ne.s32.totalorder %s61, %s75
    %p77 = scmp.eq.s32.totalorder %s16, 0
    %p78 = por %p76, %p77
    %s80 = sadd.s32 %s79, 1
    %p83 = scmp.eq.s32.totalorder %s10, 3
    %p84 = scmp.ne.s32.totalorder %s79, %s81
    %p85 = scmp.eq.s32.totalorder %s10, 0
    %p86 = por %p84, %p85
    %p87 = scmp.ne.s32.totalorder %s79, %s81
    %p88 = scmp.eq.s32.totalorder %s15, 3
    %p89 = por %p87, %p88
    %p90 = scmp.ne.s32.totalorder %s81, %s82
    %p91 = scmp.eq.s32.totalorder %s15, 0
    %p92 = por %p90, %p91
    %p93 = scmp.ne.s32.totalorder %s81, %s82
    %p94 = scmp.eq.s32.totalorder %s16, 3
    %p95 = por %p93, %p94
    %p97 = scmp.ne.s32.totalorder %s82, %s96
    %p98 = scmp.eq.s32.totalorder %s16, 0
    %p99 = por %p97, %p98
    %s101 = sadd.s32 %s100, 1
    %p104 = scmp.eq.s32.totalorder %s10, 3
    %p105 = scmp.ne.s32.totalorder %s100, %s102
    %p106 = scmp.eq.s32.totalorder %s10, 0
    %p107 = por %p105, %p106
    %p108 = scmp.ne.s32.totalorder %s100, %s102
    %p109 = scmp.eq.s32.totalorder %s15, 3
    %p110 = por %p108, %p109
    %p111 = scmp.ne.s32.totalorder %s102, %s103
    %p112 = scmp.eq.s32.totalorder %s15, 0
    %p113 = por %p111, %p112
    %p114 = scmp.ne.s32.totalorder %s102, %s103
    %p115 = scmp.eq.s32.totalorder %s16, 3
    %p116 = por %p114, %p115
    %p118 = scmp.ne.s32.totalorder %s103, %s117
    %p119 = scmp.eq.s32.totalorder %s16, 0
    %p120 = por %p118, %p119
    %s121 = ssub.s32 %s17, %s29
    %s122 = ssub.s32 %s18, %s25
    %s123 = sor.u32 %s121, %s122
    %p124 = scmp.eq.s32.totalorder %s123, 0
    %s126 = sadd.s32 %s125, 1
    %s127 = scalar_select %p124, %s125, %s126
    %p130 = pneg %p124
    %p131 = scmp.eq.s32.totalorder %s10, 3
    %p132 = por %p130, %p131
    %p133 = scmp.ne.s32.totalorder %s125, %s128
    %p134 = scmp.eq.s32.totalorder %s10, 0
    %p135 = por %p133, %p134
    %p136 = scmp.ne.s32.totalorder %s125, %s128
    %p137 = scmp.eq.s32.totalorder %s15, 3
    %p138 = por %p136, %p137
    %p139 = scmp.ne.s32.totalorder %s128, %s129
    %p140 = scmp.eq.s32.totalorder %s15, 0
    %p141 = por %p139, %p140
    %p142 = scmp.ne.s32.totalorder %s128, %s129
    %p143 = scmp.eq.s32.totalorder %s16, 3
    %p144 = por %p142, %p143
    %p146 = scmp.ne.s32.totalorder %s129, %s145
    %p147 = scmp.eq.s32.totalorder %s16, 0
    %p148 = por %p146, %p147
    %p149 = scmp.le.s32.totalorder 1, %s10
    %p150 = scmp.lt.s32.totalorder %s10, 5
    %p151 = pnand %p149, %p150
    %p152 = pneg %p151
    // Predicated region
    $region9: #{conv_block_3d.2} parent=5 // pred_check
      _
    $region10: #{conv_block_3d.2} parent=5 // pred_check_branch
      %154 = sbr.rel (%p151) target = $region12
    $region11: #{conv_block_3d.2} parent=5 // pred_region
      %s155 = ssub.s32 %s10, 1
      // Predicated region
      $region13: #{conv_block_3d.2} parent=11 // pred_check
        %p156 = pneg %p71
      $region14: #{conv_block_3d.2} parent=11 // pred_check_branch
        %158 = sbr.rel (%p156) target = $region16
      $region15: #{conv_block_3d.2} parent=11 // pred_region
        _
      $region16: #{conv_block_3d.2} parent=11 // pred_fallthru
        _
      // Predicated region
      $region17: #{conv_block_3d.2} parent=11 // pred_check
        %p159 = pneg %p92
      $region18: #{conv_block_3d.2} parent=11 // pred_check_branch
        %161 = sbr.rel (%p159) target = $region20
      $region19: #{conv_block_3d.2} parent=11 // pred_region
        _
      $region20: #{conv_block_3d.2} parent=11 // pred_fallthru
        _
      // Predicated region
      $region21: #{conv_block_3d.2} parent=11 // pred_check
        %p162 = pneg %p113
      $region22: #{conv_block_3d.2} parent=11 // pred_check_branch
        %164 = sbr.rel (%p162) target = $region24
      $region23: #{conv_block_3d.2} parent=11 // pred_region
        _
      $region24: #{conv_block_3d.2} parent=11 // pred_fallthru
        _
    $region12: #{conv_block_3d.2} parent=5 // pred_fallthru
      _
    %p165 = scmp.lt.s32.totalorder %s10, 4
    // Predicated region
    $region25: #{conv_block_3d.2} parent=5 // pred_check
      %p166 = pneg %p165
    $region26: #{conv_block_3d.2} parent=5 // pred_check_branch
      %168 = sbr.rel (%p166) target = $region28
    $region27: #{conv_block_3d.2} parent=5 // pred_region
      // Predicated region
      $region29: #{conv_block_3d.2} parent=27 // pred_check
        %p169 = pneg %p44
      $region30: #{conv_block_3d.2} parent=27 // pred_check_branch
        %171 = sbr.rel (%p169) target = $region32
      $region31: #{conv_block_3d.2} parent=27 // pred_region
        %s172 = smul.u32 32, %s18
        %p173 = scmp.lt.s32.totalorder %s17, 1
        %s174 = scalar_select %p173, %s17, 1
        %p175 = scmp.lt.s32.totalorder %s172, 63
        %s176 = scalar_select %p175, %s172, 63
        %s177 = smul.addr %s174, 64
        %s178 = sadd.s32 %s176, %s177
        %s179 = smul.addr %s178, 4
        %s180 = scalar_lea.vmem %s0, %s179
        %s181 = smul.u32 32, %s18
      $region32: #{conv_block_3d.2} parent=27 // pred_fallthru
        _
    $region28: #{conv_block_3d.2} parent=5 // pred_fallthru
      _
    %p182 = scmp.le.s32.totalorder 1, %s10
    %p183 = scmp.lt.s32.totalorder %s10, 5
    %p184 = pnand %p182, %p183
    %p185 = pneg %p184
    // Predicated region
    $region33: #{conv_block_3d.2} parent=5 // pred_check
      _
    $region34: #{conv_block_3d.2} parent=5 // pred_check_branch
      %187 = sbr.rel (%p184) target = $region36
    $region35: #{conv_block_3d.2} parent=5 // pred_region
      %s188 = ssub.s32 %s10, 1
      %s189 = smul.u32 32, %s20
      %p190 = scmp.lt.s32.totalorder %s19, 1
      %s191 = scalar_select %p190, %s19, 1
      %p192 = scmp.lt.s32.totalorder %s189, 63
      %s193 = scalar_select %p192, %s189, 63
      %s194 = smul.addr %s191, 64
      %s195 = sadd.s32 %s193, %s194
      %s196 = smul.addr %s195, 4
      %s197 = scalar_lea.vmem %s0, %s196
      %p198 = pneg %p50
      %p199 = pneg %p47
      %p200 = pneg %p71
      %p201 = pneg %p68
      %p202 = pneg %p92
      %p203 = pneg %p89
      %p204 = pneg %p113
      %p205 = pneg %p110
      %p206 = pneg %p141
      %p207 = pneg %p138
      %s208 = smul.u32 32, %s20
      %p209 = scmp.lt.s32.totalorder %s19, 1
      %s210 = scalar_select %p209, %s19, 1
      %p211 = scmp.lt.s32.totalorder %s208, 63
      %s212 = scalar_select %p211, %s208, 63
      %s213 = smul.addr %s210, 64
      %s214 = sadd.s32 %s212, %s213
      %s215 = smul.addr %s214, 4
      %s216 = scalar_lea.vmem %s4, %s215
      %s217 = smul.u32 32, %s20
      %p218 = scmp.lt.s32.totalorder %s19, 1
      %s219 = scalar_select %p218, %s19, 1
      %p220 = scmp.lt.s32.totalorder %s217, 63
      %s221 = scalar_select %p220, %s217, 63
      %s222 = smul.addr %s219, 64
      %s223 = sadd.s32 %s221, %s222
      %s224 = smul.addr %s223, 4
      %s225 = scalar_lea.vmem %s0, %s224
      %s226 = smul.u32 32, %s20
      %s227 = smul.u32 32, %s20
      %p228 = scmp.lt.s32.totalorder %s19, 1
      %s229 = scalar_select %p228, %s19, 1
      %p230 = scmp.lt.s32.totalorder %s227, 63
      %s231 = scalar_select %p230, %s227, 63
      %s232 = smul.addr %s229, 64
      %s233 = sadd.s32 %s231, %s232
      %s234 = smul.addr %s233, 4
      %s235 = scalar_lea.vmem %s4, %s234
      %s236 = smul.u32 32, %s20
      %v238 = vld [vmem:[%s225] sm:$0xf]
      %v239 = vld [vmem:[%s225 + $0x4] sm:$0xf]
      %v240 = vld [vmem:[%s225 + $0x8] sm:$0xf]
      %v241 = vld [vmem:[%s225 + $0xc] sm:$0xf]
      %v242 = vld [vmem:[%s225 + $0x10] sm:$0xf]
      %v243 = vld [vmem:[%s225 + $0x14] sm:$0xf]
      %v244 = vld [vmem:[%s225 + $0x18] sm:$0xf]
      %v245 = vld [vmem:[%s225 + $0x1c] sm:$0xf]
      %v246 = vld [vmem:[%s225 + $0x20] sm:$0xf]
      %v247 = vld [vmem:[%s225 + $0x24] sm:$0xf]
      %v248 = vld [vmem:[%s225 + $0x28] sm:$0xf]
      %v249 = vld [vmem:[%s225 + $0x2c] sm:$0xf]
      %v250 = vld [vmem:[%s225 + $0x30] sm:$0xf]
      %v251 = vld [vmem:[%s225 + $0x34] sm:$0xf]
      %v252 = vld [vmem:[%s225 + $0x38] sm:$0xf]
      %v253 = vld [vmem:[%s225 + $0x3c] sm:$0xf]
      %v254 = vld [vmem:[%s225 + $0x40] sm:$0xf]
      %v255 = vld [vmem:[%s225 + $0x44] sm:$0xf]
      %v256 = vld [vmem:[%s225 + $0x48] sm:$0xf]
      %v257 = vld [vmem:[%s225 + $0x4c] sm:$0xf]
      %v258 = vld [vmem:[%s225 + $0x50] sm:$0xf]
      %v259 = vld [vmem:[%s225 + $0x54] sm:$0xf]
      %v260 = vld [vmem:[%s225 + $0x58] sm:$0xf]
      %v261 = vld [vmem:[%s225 + $0x5c] sm:$0xf]
      %v262 = vld [vmem:[%s225 + $0x60] sm:$0xf]
      %v263 = vld [vmem:[%s225 + $0x64] sm:$0xf]
      %v264 = vld [vmem:[%s225 + $0x68] sm:$0xf]
      %v265 = vld [vmem:[%s225 + $0x6c] sm:$0xf]
      %v266 = vld [vmem:[%s225 + $0x70] sm:$0xf]
      %v267 = vld [vmem:[%s225 + $0x74] sm:$0xf]
      %v268 = vld [vmem:[%s225 + $0x78] sm:$0xf]
      %v269 = vld [vmem:[%s225 + $0x7c] sm:$0xf]
      %v270 = vld [vmem:[%s1] sm:$0xf]
      %v271 = vld [vmem:[%s1 + $0x4] sm:$0xf]
      %v272 = vld [vmem:[%s1 + $0x8] sm:$0xf]
      %v273 = vld [vmem:[%s1 + $0xc] sm:$0xf]
      %v274 = vld [vmem:[%s1 + $0x10] sm:$0xf]
      %v275 = vld [vmem:[%s1 + $0x14] sm:$0xf]
      %v276 = vld [vmem:[%s1 + $0x18] sm:$0xf]
      %v277 = vld [vmem:[%s1 + $0x1c] sm:$0xf]
      %v278 = vld [vmem:[%s1 + $0x20] sm:$0xf]
      %v279 = vld [vmem:[%s1 + $0x24] sm:$0xf]
      %v280 = vld [vmem:[%s1 + $0x28] sm:$0xf]
      %v281 = vld [vmem:[%s1 + $0x2c] sm:$0xf]
      %v282 = vld [vmem:[%s1 + $0x30] sm:$0xf]
      %v283 = vld [vmem:[%s1 + $0x34] sm:$0x3]
      %v316 = vunpack.c.l.b16 %v238
      %v317 = vunpack.c.l.b16 %v239
      %v318 = vunpack.c.l.b16 %v240
      %v319 = vunpack.c.l.b16 %v241
      %v320 = vunpack.c.l.b16 %v242
      %v321 = vunpack.c.l.b16 %v243
      %v322 = vunpack.c.l.b16 %v244
      %v323 = vunpack.c.l.b16 %v245
      %v324 = vunpack.c.l.b16 %v246
      %v325 = vunpack.c.l.b16 %v247
      %v326 = vunpack.c.l.b16 %v248
      %v327 = vunpack.c.l.b16 %v249
      %v328 = vunpack.c.l.b16 %v250
      %v329 = vunpack.c.l.b16 %v251
      %v330 = vunpack.c.l.b16 %v252
      %v331 = vunpack.c.l.b16 %v253
      %v332 = vunpack.c.l.b16 %v254
      %v333 = vunpack.c.l.b16 %v255
      %v334 = vunpack.c.l.b16 %v256
      %v335 = vunpack.c.l.b16 %v257
      %v336 = vunpack.c.l.b16 %v258
      %v337 = vunpack.c.l.b16 %v259
      %v338 = vunpack.c.l.b16 %v260
      %v339 = vunpack.c.l.b16 %v261
      %v340 = vunpack.c.l.b16 %v262
      %v341 = vunpack.c.l.b16 %v263
      %v342 = vunpack.c.l.b16 %v264
      %v343 = vunpack.c.l.b16 %v265
      %v344 = vunpack.c.l.b16 %v266
      %v345 = vunpack.c.l.b16 %v267
      %v346 = vunpack.c.l.b16 %v268
      %v347 = vunpack.c.l.b16 %v269
      %v348 = vpack.c.b16 %v317, %v316
      %v349 = vpack.c.b16 %v319, %v318
      %v350 = vpack.c.b16 %v321, %v320
      %v351 = vpack.c.b16 %v323, %v322
      %v352 = vpack.c.b16 %v325, %v324
      %v353 = vpack.c.b16 %v327, %v326
      %v354 = vpack.c.b16 %v329, %v328
      %v355 = vpack.c.b16 %v331, %v330
      %v356 = vpack.c.b16 %v333, %v332
      %v357 = vpack.c.b16 %v335, %v334
      %v358 = vpack.c.b16 %v337, %v336
      %v359 = vpack.c.b16 %v339, %v338
      %v360 = vpack.c.b16 %v341, %v340
      %v361 = vpack.c.b16 %v343, %v342
      %v362 = vpack.c.b16 %v345, %v344
      %v363 = vpack.c.b16 %v347, %v346
      %v378 = vunpack.c.l.b16 %v270
      %v379 = vunpack.c.l.b16 %v271
      %v380 = vunpack.c.l.b16 %v272
      %v381 = vunpack.c.l.b16 %v273
      %v382 = vunpack.c.l.b16 %v274
      %v383 = vunpack.c.l.b16 %v275
      %v384 = vunpack.c.l.b16 %v276
      %v385 = vunpack.c.l.b16 %v277
      %v386 = vunpack.c.l.b16 %v278
      %v387 = vunpack.c.l.b16 %v279
      %v388 = vunpack.c.l.b16 %v280
      %v389 = vunpack.c.l.b16 %v281
      %v390 = vunpack.c.l.b16 %v282
      %v391 = vunpack.c.l.b16 %v283
      %v392 = vpack.c.b16 %v379, %v378
      %v393 = vpack.c.b16 %v381, %v380
      %v394 = vpack.c.b16 %v383, %v382
      %v395 = vpack.c.b16 %v385, %v384
      %v396 = vpack.c.b16 %v387, %v386
      %v397 = vpack.c.b16 %v389, %v388
      %v398 = vpack.c.b16 %v391, %v390
      %vm405 = vcmask 883712
      %v407 = vsel %vm405, %v348, 0
      %v410 = vsel %vm405, %v349, 0
      %v413 = vsel %vm405, %v350, 0
      %v416 = vsel %vm405, %v351, 0
      %v419 = vsel %vm405, %v352, 0
      %v422 = vsel %vm405, %v353, 0
      %v425 = vsel %vm405, %v354, 0
      %v428 = vsel %vm405, %v355, 0
      %v431 = vsel %vm405, %v356, 0
      %v434 = vsel %vm405, %v357, 0
      %v437 = vsel %vm405, %v358, 0
      %v440 = vsel %vm405, %v359, 0
      %v443 = vsel %vm405, %v360, 0
      %v446 = vsel %vm405, %v361, 0
      %v449 = vsel %vm405, %v362, 0
      %v452 = vsel %vm405, %v363, 0
      %vm454 = vcmask 1045504
      %v456 = vsel %vm454, %v398, 0
      %458 = vmatprep.subr.bf16.mxu0 0
      %459 = vmatpush1.bf16.msra.mxu0 %v392
      %460 = vmatprep.subr.bf16.mxu0 0
      %461 = vmatpush1.bf16.msra.mxu0 %v393
      %462 = vmatprep.subr.bf16.mxu0 0
      %463 = vmatpush1.bf16.msra.mxu0 %v394
      %464 = vmatprep.subr.bf16.mxu0 0
      %465 = vmatpush1.bf16.msra.mxu0 %v395
      %466 = vmatprep.subr.bf16.mxu0 0
      %467 = vmatpush1.bf16.msra.mxu0 %v396
      %468 = vmatprep.subr.bf16.mxu0 0
      %469 = vmatpush1.bf16.msra.mxu0 %v397
      %470 = vmatprep.subr.bf16.mxu0 0
      %471 = vmatpush1.bf16.msra.mxu0 %v456
      %472 = vmatprep.subr.bf16.mxu0 0
      %473 = vmatpush1.bf16.msra.mxu0 0
      %474 = vmatprep.subr.bf16.mxu0 0
      %475 = vmatpush1.bf16.msra.mxu0 0
      %476 = vmatprep.subr.bf16.mxu0 0
      %477 = vmatpush1.bf16.msra.mxu0 0
      %478 = vmatprep.subr.bf16.mxu0 0
      %479 = vmatpush1.bf16.msra.mxu0 0
      %480 = vmatprep.subr.bf16.mxu0 0
      %481 = vmatpush1.bf16.msra.mxu0 0
      %482 = vmatprep.subr.bf16.mxu0 0
      %483 = vmatpush1.bf16.msra.mxu0 0
      %484 = vmatprep.subr.bf16.mxu0 0
      %485 = vmatpush1.bf16.msra.mxu0 0
      %486 = vmatprep.subr.bf16.mxu0 0
      %487 = vmatpush1.bf16.msra.mxu0 0
      %488 = vmatprep.subr.bf16.mxu0 0
      %489 = vmatpush1.bf16.msra.mxu0 0
      %490 = vmatprep.mubr.bf16.mxu0 0
      %491 = vmatmul.mubr.bf16.gmra.mrb[0].mxu0 %v407
      %v492 = vpop.f32.mrb[0].mxu0
      %v493 = vadd.f32 0.0, %v492
      %v494 = vpop.f32.mrb[0].mxu0
      %v495 = vpop.f32.mrb[0].mxu0
      %v496 = vadd.f32 0.0, %v495
      %v497 = vpop.f32.mrb[0].mxu0
      %498 = vmatprep.mubr.bf16.mxu0 0
      %499 = vmatmul.mubr.bf16.gmra.mrb[0].mxu0 %v410
      %v500 = vpop.f32.mrb[0].mxu0
      %v501 = vadd.f32 0.0, %v500
      %v502 = vpop.f32.mrb[0].mxu0
      %v503 = vpop.f32.mrb[0].mxu0
      %v504 = vadd.f32 0.0, %v503
      %v505 = vpop.f32.mrb[0].mxu0
      %506 = vmatprep.mubr.bf16.mxu0 0
      %507 = vmatmul.mubr.bf16.gmra.mrb[0].mxu0 %v413
      %v508 = vpop.f32.mrb[0].mxu0
      %v509 = vadd.f32 0.0, %v508
      %v510 = vpop.f32.mrb[0].mxu0
      %v511 = vpop.f32.mrb[0].mxu0
      %v512 = vadd.f32 0.0, %v511
      %v513 = vpop.f32.mrb[0].mxu0
      %514 = vmatprep.mubr.bf16.mxu0 0
      %515 = vmatmul.mubr.bf16.gmra.mrb[0].mxu0 %v416
      %v516 = vpop.f32.mrb[0].mxu0
      %v517 = vadd.f32 0.0, %v516
      %v518 = vpop.f32.mrb[0].mxu0
      %v519 = vpop.f32.mrb[0].mxu0
      %v520 = vadd.f32 0.0, %v519
      %v521 = vpop.f32.mrb[0].mxu0
      %522 = vmatprep.mubr.bf16.mxu0 0
      %523 = vmatmul.mubr.bf16.gmra.mrb[0].mxu0 %v419
      %v524 = vpop.f32.mrb[0].mxu0
      %v525 = vadd.f32 0.0, %v524
      %v526 = vpop.f32.mrb[0].mxu0
      %v527 = vpop.f32.mrb[0].mxu0
      %v528 = vadd.f32 0.0, %v527
      %v529 = vpop.f32.mrb[0].mxu0
      %530 = vmatprep.mubr.bf16.mxu0 0
      %531 = vmatmul.mubr.bf16.gmra.mrb[0].mxu0 %v422
      %v532 = vpop.f32.mrb[0].mxu0
      %v533 = vadd.f32 0.0, %v532
      %v534 = vpop.f32.mrb[0].mxu0
      %v535 = vpop.f32.mrb[0].mxu0
      %v536 = vadd.f32 0.0, %v535
      %v537 = vpop.f32.mrb[0].mxu0
      %538 = vmatprep.mubr.bf16.mxu0 0
      %539 = vmatmul.mubr.bf16.gmra.mrb[0].mxu0 %v425
      %v540 = vpop.f32.mrb[0].mxu0
      %v541 = vadd.f32 0.0, %v540
      %v542 = vpop.f32.mrb[0].mxu0
      %v543 = vpop.f32.mrb[0].mxu0
      %v544 = vadd.f32 0.0, %v543
      %v545 = vpop.f32.mrb[0].mxu0
      %546 = vmatprep.mubr.bf16.mxu0 0
      %547 = vmatmul.mubr.bf16.gmra.mrb[0].mxu0 %v428
      %v548 = vpop.f32.mrb[0].mxu0
      %v549 = vadd.f32 0.0, %v548
      %v550 = vpop.f32.mrb[0].mxu0
      %v551 = vpop.f32.mrb[0].mxu0
      %v552 = vadd.f32 0.0, %v551
      %v553 = vpop.f32.mrb[0].mxu0
      %554 = vmatprep.mubr.bf16.mxu0 0
      %555 = vmatmul.mubr.bf16.gmra.mrb[0].mxu0 %v431
      %v556 = vpop.f32.mrb[0].mxu0
      %v557 = vadd.f32 0.0, %v556
      %v558 = vpop.f32.mrb[0].mxu0
      %v559 = vpop.f32.mrb[0].mxu0
      %v560 = vadd.f32 0.0, %v559
      %v561 = vpop.f32.mrb[0].mxu0
      %562 = vmatprep.mubr.bf16.mxu0 0
      %563 = vmatmul.mubr.bf16.gmra.mrb[0].mxu0 %v434
      %v564 = vpop.f32.mrb[0].mxu0
      %v565 = vadd.f32 0.0, %v564
      %v566 = vpop.f32.mrb[0].mxu0
      %v567 = vpop.f32.mrb[0].mxu0
      %v568 = vadd.f32 0.0, %v567
      %v569 = vpop.f32.mrb[0].mxu0
      %570 = vmatprep.mubr.bf16.mxu0 0
      %571 = vmatmul.mubr.bf16.gmra.mrb[0].mxu0 %v437
      %v572 = vpop.f32.mrb[0].mxu0
      %v573 = vadd.f32 0.0, %v572
      %v574 = vpop.f32.mrb[0].mxu0
      %v575 = vpop.f32.mrb[0].mxu0
      %v576 = vadd.f32 0.0, %v575
      %v577 = vpop.f32.mrb[0].mxu0
      %578 = vmatprep.mubr.bf16.mxu0 0
      %579 = vmatmul.mubr.bf16.gmra.mrb[0].mxu0 %v440
      %v580 = vpop.f32.mrb[0].mxu0
      %v581 = vadd.f32 0.0, %v580
      %v582 = vpop.f32.mrb[0].mxu0
      %v583 = vpop.f32.mrb[0].mxu0
      %v584 = vadd.f32 0.0, %v583
      %v585 = vpop.f32.mrb[0].mxu0
      %586 = vmatprep.mubr.bf16.mxu0 0
      %587 = vmatmul.mubr.bf16.gmra.mrb[0].mxu0 %v443
      %v588 = vpop.f32.mrb[0].mxu0
      %v589 = vadd.f32 0.0, %v588
      %v590 = vpop.f32.mrb[0].mxu0
      %v591 = vpop.f32.mrb[0].mxu0
      %v592 = vadd.f32 0.0, %v591
      %v593 = vpop.f32.mrb[0].mxu0
      %594 = vmatprep.mubr.bf16.mxu0 0
      %595 = vmatmul.mubr.bf16.gmra.mrb[0].mxu0 %v446
      %v596 = vpop.f32.mrb[0].mxu0
      %v597 = vadd.f32 0.0, %v596
      %v598 = vpop.f32.mrb[0].mxu0
      %v599 = vpop.f32.mrb[0].mxu0
      %v600 = vadd.f32 0.0, %v599
      %v601 = vpop.f32.mrb[0].mxu0
      %602 = vmatprep.mubr.bf16.mxu0 0
      %603 = vmatmul.mubr.bf16.gmra.mrb[0].mxu0 %v449
      %v604 = vpop.f32.mrb[0].mxu0
      %v605 = vadd.f32 0.0, %v604
      %v606 = vpop.f32.mrb[0].mxu0
      %v607 = vpop.f32.mrb[0].mxu0
      %v608 = vadd.f32 0.0, %v607
      %v609 = vpop.f32.mrb[0].mxu0
      %610 = vmatprep.mubr.bf16.mxu0 0
      %611 = vmatmul.mubr.bf16.gmra.mrb[0].mxu0 %v452
      %v612 = vpop.f32.mrb[0].mxu0
      %v613 = vadd.f32 0.0, %v612
      %v614 = vpop.f32.mrb[0].mxu0
      %v615 = vpop.f32.mrb[0].mxu0
      %v616 = vadd.f32 0.0, %v615
      %v617 = vpop.f32.mrb[0].mxu0
      %618 = vdwg.mxu0
      %v619 = vld [vmem:[%s2] sm:$0x1]
      %v621 = vlaneseq
      %v622 = vshrl.u32 %v621, 7
      %v623 = vsub.s32 0, %v622
      %v624 = vrot.slane %v619, %v623
      %v626 = vmul.f32 %v493, %v624
      %v627 = vmul.f32 %v496, %v624
      %v628 = vmul.f32 %v501, %v624
      %v629 = vmul.f32 %v504, %v624
      %v630 = vmul.f32 %v509, %v624
      %v631 = vmul.f32 %v512, %v624
      %v632 = vmul.f32 %v517, %v624
      %v633 = vmul.f32 %v520, %v624
      %v634 = vmul.f32 %v525, %v624
      %v635 = vmul.f32 %v528, %v624
      %v636 = vmul.f32 %v533, %v624
      %v637 = vmul.f32 %v536, %v624
      %v638 = vmul.f32 %v541, %v624
      %v639 = vmul.f32 %v544, %v624
      %v640 = vmul.f32 %v549, %v624
      %v641 = vmul.f32 %v552, %v624
      %v642 = vmul.f32 %v557, %v624
      %v643 = vmul.f32 %v560, %v624
      %v644 = vmul.f32 %v565, %v624
      %v645 = vmul.f32 %v568, %v624
      %v646 = vmul.f32 %v573, %v624
      %v647 = vmul.f32 %v576, %v624
      %v648 = vmul.f32 %v581, %v624
      %v649 = vmul.f32 %v584, %v624
      %v650 = vmul.f32 %v589, %v624
      %v651 = vmul.f32 %v592, %v624
      %v652 = vmul.f32 %v597, %v624
      %v653 = vmul.f32 %v600, %v624
      %v654 = vmul.f32 %v605, %v624
      %v655 = vmul.f32 %v608, %v624
      %v656 = vmul.f32 %v613, %v624
      %v657 = vmul.f32 %v616, %v624
      %v658 = vld [vmem:[%s3] sm:$0x1]
      %v660 = vlaneseq
      %v661 = vshrl.u32 %v660, 7
      %v662 = vsub.s32 0, %v661
      %v663 = vrot.slane %v658, %v662
      %v665 = vadd.f32 %v626, %v663
      %v666 = vadd.f32 %v627, %v663
      %v667 = vadd.f32 %v628, %v663
      %v668 = vadd.f32 %v629, %v663
      %v669 = vadd.f32 %v630, %v663
      %v670 = vadd.f32 %v631, %v663
      %v671 = vadd.f32 %v632, %v663
      %v672 = vadd.f32 %v633, %v663
      %v673 = vadd.f32 %v634, %v663
      %v674 = vadd.f32 %v635, %v663
      %v675 = vadd.f32 %v636, %v663
      %v676 = vadd.f32 %v637, %v663
      %v677 = vadd.f32 %v638, %v663
      %v678 = vadd.f32 %v639, %v663
      %v679 = vadd.f32 %v640, %v663
      %v680 = vadd.f32 %v641, %v663
      %v681 = vadd.f32 %v642, %v663
      %v682 = vadd.f32 %v643, %v663
      %v683 = vadd.f32 %v644, %v663
      %v684 = vadd.f32 %v645, %v663
      %v685 = vadd.f32 %v646, %v663
      %v686 = vadd.f32 %v647, %v663
      %v687 = vadd.f32 %v648, %v663
      %v688 = vadd.f32 %v649, %v663
      %v689 = vadd.f32 %v650, %v663
      %v690 = vadd.f32 %v651, %v663
      %v691 = vadd.f32 %v652, %v663
      %v692 = vadd.f32 %v653, %v663
      %v693 = vadd.f32 %v654, %v663
      %v694 = vadd.f32 %v655, %v663
      %v695 = vadd.f32 %v656, %v663
      %v696 = vadd.f32 %v657, %v663
      %v697 = vmax.f32 %v665, 0.0
      %v698 = vmax.f32 %v666, 0.0
      %v699 = vmax.f32 %v667, 0.0
      %v700 = vmax.f32 %v668, 0.0
      %v701 = vmax.f32 %v669, 0.0
      %v702 = vmax.f32 %v670, 0.0
      %v703 = vmax.f32 %v671, 0.0
      %v704 = vmax.f32 %v672, 0.0
      %v705 = vmax.f32 %v673, 0.0
      %v706 = vmax.f32 %v674, 0.0
      %v707 = vmax.f32 %v675, 0.0
      %v708 = vmax.f32 %v676, 0.0
      %v709 = vmax.f32 %v677, 0.0
      %v710 = vmax.f32 %v678, 0.0
      %v711 = vmax.f32 %v679, 0.0
      %v712 = vmax.f32 %v680, 0.0
      %v713 = vmax.f32 %v681, 0.0
      %v714 = vmax.f32 %v682, 0.0
      %v715 = vmax.f32 %v683, 0.0
      %v716 = vmax.f32 %v684, 0.0
      %v717 = vmax.f32 %v685, 0.0
      %v718 = vmax.f32 %v686, 0.0
      %v719 = vmax.f32 %v687, 0.0
      %v720 = vmax.f32 %v688, 0.0
      %v721 = vmax.f32 %v689, 0.0
      %v722 = vmax.f32 %v690, 0.0
      %v723 = vmax.f32 %v691, 0.0
      %v724 = vmax.f32 %v692, 0.0
      %v725 = vmax.f32 %v693, 0.0
      %v726 = vmax.f32 %v694, 0.0
      %v727 = vmax.f32 %v695, 0.0
      %v728 = vmax.f32 %v696, 0.0
      %v729 = vpack.c.bf16 %v698, %v697
      %v730 = vpack.c.bf16 %v700, %v699
      %v731 = vpack.c.bf16 %v702, %v701
      %v732 = vpack.c.bf16 %v704, %v703
      %v733 = vpack.c.bf16 %v706, %v705
      %v734 = vpack.c.bf16 %v708, %v707
      %v735 = vpack.c.bf16 %v710, %v709
      %v736 = vpack.c.bf16 %v712, %v711
      %v737 = vpack.c.bf16 %v714, %v713
      %v738 = vpack.c.bf16 %v716, %v715
      %v739 = vpack.c.bf16 %v718, %v717
      %v740 = vpack.c.bf16 %v720, %v719
      %v741 = vpack.c.bf16 %v722, %v721
      %v742 = vpack.c.bf16 %v724, %v723
      %v743 = vpack.c.bf16 %v726, %v725
      %v744 = vpack.c.bf16 %v728, %v727
      %v761 = vunpack.c.l.b16 %v729
      %v762 = vunpack.c.h.b16 %v729
      %v763 = vunpack.c.l.b16 %v730
      %v764 = vunpack.c.h.b16 %v730
      %v765 = vunpack.c.l.b16 %v731
      %v766 = vunpack.c.h.b16 %v731
      %v767 = vunpack.c.l.b16 %v732
      %v768 = vunpack.c.h.b16 %v732
      %v769 = vunpack.c.l.b16 %v733
      %v770 = vunpack.c.h.b16 %v733
      %v771 = vunpack.c.l.b16 %v734
      %v772 = vunpack.c.h.b16 %v734
      %v773 = vunpack.c.l.b16 %v735
      %v774 = vunpack.c.h.b16 %v735
      %v775 = vunpack.c.l.b16 %v736
      %v776 = vunpack.c.h.b16 %v736
      %v777 = vunpack.c.l.b16 %v737
      %v778 = vunpack.c.h.b16 %v737
      %v779 = vunpack.c.l.b16 %v738
      %v780 = vunpack.c.h.b16 %v738
      %v781 = vunpack.c.l.b16 %v739
      %v782 = vunpack.c.h.b16 %v739
      %v783 = vunpack.c.l.b16 %v740
      %v784 = vunpack.c.h.b16 %v740
      %v785 = vunpack.c.l.b16 %v741
      %v786 = vunpack.c.h.b16 %v741
      %v787 = vunpack.c.l.b16 %v742
      %v788 = vunpack.c.h.b16 %v742
      %v789 = vunpack.c.l.b16 %v743
      %v790 = vunpack.c.h.b16 %v743
      %v791 = vunpack.c.l.b16 %v744
      %v792 = vunpack.c.h.b16 %v744
      %v793 = vpack.c.b16 %v761, %v761
      %v794 = vpack.c.b16 %v762, %v762
      %v795 = vpack.c.b16 %v763, %v763
      %v796 = vpack.c.b16 %v764, %v764
      %v797 = vpack.c.b16 %v765, %v765
      %v798 = vpack.c.b16 %v766, %v766
      %v799 = vpack.c.b16 %v767, %v767
      %v800 = vpack.c.b16 %v768, %v768
      %v801 = vpack.c.b16 %v769, %v769
      %v802 = vpack.c.b16 %v770, %v770
      %v803 = vpack.c.b16 %v771, %v771
      %v804 = vpack.c.b16 %v772, %v772
      %v805 = vpack.c.b16 %v773, %v773
      %v806 = vpack.c.b16 %v774, %v774
      %v807 = vpack.c.b16 %v775, %v775
      %v808 = vpack.c.b16 %v776, %v776
      %v809 = vpack.c.b16 %v777, %v777
      %v810 = vpack.c.b16 %v778, %v778
      %v811 = vpack.c.b16 %v779, %v779
      %v812 = vpack.c.b16 %v780, %v780
      %v813 = vpack.c.b16 %v781, %v781
      %v814 = vpack.c.b16 %v782, %v782
      %v815 = vpack.c.b16 %v783, %v783
      %v816 = vpack.c.b16 %v784, %v784
      %v817 = vpack.c.b16 %v785, %v785
      %v818 = vpack.c.b16 %v786, %v786
      %v819 = vpack.c.b16 %v787, %v787
      %v820 = vpack.c.b16 %v788, %v788
      %v821 = vpack.c.b16 %v789, %v789
      %v822 = vpack.c.b16 %v790, %v790
      %v823 = vpack.c.b16 %v791, %v791
      %v824 = vpack.c.b16 %v792, %v792
      %857 = vst [vmem:[%s235] sm:$0xf] %v793
      %858 = vst [vmem:[%s235 + $0x4] sm:$0xf] %v794
      %859 = vst [vmem:[%s235 + $0x8] sm:$0xf] %v795
      %860 = vst [vmem:[%s235 + $0xc] sm:$0xf] %v796
      %861 = vst [vmem:[%s235 + $0x10] sm:$0xf] %v797
      %862 = vst [vmem:[%s235 + $0x14] sm:$0xf] %v798
      %863 = vst [vmem:[%s235 + $0x18] sm:$0xf] %v799
      %864 = vst [vmem:[%s235 + $0x1c] sm:$0xf] %v800
      %865 = vst [vmem:[%s235 + $0x20] sm:$0xf] %v801
      %866 = vst [vmem:[%s235 + $0x24] sm:$0xf] %v802
      %867 = vst [vmem:[%s235 + $0x28] sm:$0xf] %v803
      %868 = vst [vmem:[%s235 + $0x2c] sm:$0xf] %v804
      %869 = vst [vmem:[%s235 + $0x30] sm:$0xf] %v805
      %870 = vst [vmem:[%s235 + $0x34] sm:$0xf] %v806
      %871 = vst [vmem:[%s235 + $0x38] sm:$0xf] %v807
      %872 = vst [vmem:[%s235 + $0x3c] sm:$0xf] %v808
      %873 = vst [vmem:[%s235 + $0x40] sm:$0xf] %v809
      %874 = vst [vmem:[%s235 + $0x44] sm:$0xf] %v810
      %875 = vst [vmem:[%s235 + $0x48] sm:$0xf] %v811
      %876 = vst [vmem:[%s235 + $0x4c] sm:$0xf] %v812
      %877 = vst [vmem:[%s235 + $0x50] sm:$0xf] %v813
      %878 = vst [vmem:[%s235 + $0x54] sm:$0xf] %v814
      %879 = vst [vmem:[%s235 + $0x58] sm:$0xf] %v815
      %880 = vst [vmem:[%s235 + $0x5c] sm:$0xf] %v816
      %881 = vst [vmem:[%s235 + $0x60] sm:$0xf] %v817
      %882 = vst [vmem:[%s235 + $0x64] sm:$0xf] %v818
      %883 = vst [vmem:[%s235 + $0x68] sm:$0xf] %v819
      %884 = vst [vmem:[%s235 + $0x6c] sm:$0xf] %v820
      %885 = vst [vmem:[%s235 + $0x70] sm:$0xf] %v821
      %886 = vst [vmem:[%s235 + $0x74] sm:$0xf] %v822
      %887 = vst [vmem:[%s235 + $0x78] sm:$0xf] %v823
      %888 = vst [vmem:[%s235 + $0x7c] sm:$0xf] %v824
      %s889 = smul.u32 32, %s20
      %p890 = scmp.lt.s32.totalorder %s19, 1
      %s891 = scalar_select %p890, %s19, 1
      %p892 = scmp.lt.s32.totalorder %s889, 63
      %s893 = scalar_select %p892, %s889, 63
      %s894 = smul.addr %s891, 64
      %s895 = sadd.s32 %s893, %s894
      %s896 = smul.addr %s895, 4
      %s897 = scalar_lea.vmem %s4, %s896
      // Predicated region
      $region37: #{conv_block_3d.2} parent=35 // pred_check
        %p898 = pneg %p138
      $region38: #{conv_block_3d.2} parent=35 // pred_check_branch
        %900 = sbr.rel (%p898) target = $region40
      $region39: #{conv_block_3d.2} parent=35 // pred_region
        %s901 = smul.u32 32, %s20
      $region40: #{conv_block_3d.2} parent=35 // pred_fallthru
        _
    $region36: #{conv_block_3d.2} parent=5 // pred_fallthru
      _
    %p902 = scmp.le.s32.totalorder 2, %s10
    // Predicated region
    $region41: #{conv_block_3d.2} parent=5 // pred_check
      %p903 = pneg %p902
    $region42: #{conv_block_3d.2} parent=5 // pred_check_branch
      %905 = sbr.rel (%p903) target = $region44
    $region43: #{conv_block_3d.2} parent=5 // pred_region
      %s906 = ssub.s32 %s10, 2
      // Predicated region
      $region45: #{conv_block_3d.2} parent=43 // pred_check
        %p907 = pneg %p144
      $region46: #{conv_block_3d.2} parent=43 // pred_check_branch
        %909 = sbr.rel (%p907) target = $region48
      $region47: #{conv_block_3d.2} parent=43 // pred_region
        %s910 = smul.u32 32, %s22
        %p911 = scmp.lt.s32.totalorder %s21, 1
        %s912 = scalar_select %p911, %s21, 1
        %p913 = scmp.lt.s32.totalorder %s910, 63
        %s914 = scalar_select %p913, %s910, 63
        %s915 = smul.addr %s912, 64
        %s916 = sadd.s32 %s914, %s915
        %s917 = smul.addr %s916, 4
        %s918 = scalar_lea.vmem %s4, %s917
      $region48: #{conv_block_3d.2} parent=43 // pred_fallthru
        _
    $region44: #{conv_block_3d.2} parent=5 // pred_fallthru
      _
  $region6: #{conv_block_3d.2} parent=0 // loop_footer
    %s14 = sadd.s32 1, %s10
  $region7: #{conv_block_3d.2} parent=0 // loop_footer_branch
    %9 = sbr.rel target = $region3
  $region8: #{conv_block_3d.2} parent=0 // loop_exit
    _

// kernel: conv_block_3d.3
$region0: #{conv_block_3d.3}
  #allocation0 [shape = 'u32[]', space=smem, size = 0x4, offset = 0x4, fixed_abs, tag = 'smem constant byte address 0x4 - core index']
  #allocation1 [shape = 'u32[144,128]{1,0:T(1,128)}', space=vmem, size = 0x12000, scoped, tag = 'internal scratch']
  %s0 = inlined_call_operand.vmem [shape: bf16[2,512,216], index: 0, kind: input, shape index: {}]
  %s1 = inlined_call_operand.vmem [shape: bf16[216,128], index: 1, kind: input, shape index: {}]
  %s2 = inlined_call_operand.vmem [shape: f32[1,128], index: 2, kind: input, shape index: {}]
  %s3 = inlined_call_operand.vmem [shape: f32[1,128], index: 3, kind: input, shape index: {}]
  %s4 = inlined_call_operand.hbm [shape: f32[2,512,128], index: 4, kind: output, shape index: {}]
  %s5 = sld [smem:[#allocation0]]
  $region49: #{conv_block_3d.3} parent=0
    _
  %s7 = ssub.s32 1, %s5
  %s8 = scalar_select 0, %s7, %s5
  $region1: #{conv_block_3d.3} parent=0
    #allocation2 [shape = 'u8[262144]{0}', space=vmem, size = 0x40000, scoped, tag = 'output window, operand 0']
    #allocation3 [shape = 's32[2]{0}', space=sflag, size = 0x8, scoped, tag = 'scoped memory for conv_block_3d.3']
    %9 = vsyncpa [#allocation3], 0
    %s10 = scalar_lea.sflag [#allocation3], 1
    %11 = vsyncpa %s10, 0
    loop: start=0, step=1, limit=6
    $region2: #{conv_block_3d.3} parent=1 // loop_pre_header
      _
    $region3: #{conv_block_3d.3} parent=1 // loop_header
      %s13 = sphi 0, %s17
      %p14 = scmp.ge.s32.totalorder %s13, 6
      %s20 = sphi 0, %s32
      %s21 = sphi 0, %s28
      %s22 = sphi 0, %s20
      %s23 = sphi 0, %s21
      %s24 = sphi 0, %s22
      %s25 = sphi 0, %s23
      %s37 = sphi 0, %s39
      %s40 = sphi 0, %s37
      %s41 = sphi 0, %s40
      %s57 = sphi 0, %s41
      %s61 = sphi 0, %s61
      %s63 = sphi 0, %s61
      %s64 = sphi 0, %s63
      %s78 = sphi 0, %s64
      %s82 = sphi 0, %s82
      %s84 = sphi 0, %s82
      %s85 = sphi 0, %s84
      %s99 = sphi 0, %s85
      %s103 = sphi 0, %s103
      %s105 = sphi 0, %s103
      %s106 = sphi 0, %s105
      %s120 = sphi 0, %s106
      %s128 = sphi 0, %s130
      %s131 = sphi 0, %s128
      %s132 = sphi 0, %s131
      %s148 = sphi 0, %s132
    $region4: #{conv_block_3d.3} parent=1 // loop_header_branch
      %16 = sbr.rel (%p14) target = $region8
    $region5: #{conv_block_3d.3} parent=1 // loop_body
      %s18 = ssub.s32 %s13, 1
      %s19 = ssub.s32 %s13, 2
      %s26 = sadd.s32 1, %s21
      %p27 = scmp.ge.s32.totalorder %s26, 2
      %s28 = scalar_select %p27, 0, %s26
      %s29 = sadd.s32 1, %s20
      %s30 = scalar_select %p27, %s29, %s20
      %p31 = scmp.ge.s32.totalorder %s30, 2
      %s32 = scalar_select %p31, 0, %s30
      %s33 = ssub.s32 %s20, %s32
      %s34 = ssub.s32 %s21, %s28
      %s35 = sor.u32 %s33, %s34
      %p36 = scmp.eq.s32.totalorder %s35, 0
      %s38 = sadd.s32 %s37, 1
      %s39 = scalar_select %p36, %s37, %s38
      %p42 = pneg %p36
      %p43 = scmp.eq.s32.totalorder %s13, 3
      %p44 = por %p42, %p43
      %p45 = scmp.ne.s32.totalorder %s37, %s40
      %p46 = scmp.eq.s32.totalorder %s13, 0
      %p47 = por %p45, %p46
      %p48 = scmp.ne.s32.totalorder %s37, %s40
      %p49 = scmp.eq.s32.totalorder %s18, 3
      %p50 = por %p48, %p49
      %p51 = scmp.ne.s32.totalorder %s40, %s41
      %p52 = scmp.eq.s32.totalorder %s18, 0
      %p53 = por %p51, %p52
      %p54 = scmp.ne.s32.totalorder %s40, %s41
      %p55 = scmp.eq.s32.totalorder %s19, 3
      %p56 = por %p54, %p55
      %p58 = scmp.ne.s32.totalorder %s41, %s57
      %p59 = scmp.eq.s32.totalorder %s19, 0
      %p60 = por %p58, %p59
      %s62 = sadd.s32 %s61, 1
      %p65 = scmp.eq.s32.totalorder %s13, 3
      %p66 = scmp.ne.s32.totalorder %s61, %s63
      %p67 = scmp.eq.s32.totalorder %s13, 0
      %p68 = por %p66, %p67
      %p69 = scmp.ne.s32.totalorder %s61, %s63
      %p70 = scmp.eq.s32.totalorder %s18, 3
      %p71 = por %p69, %p70
      %p72 = scmp.ne.s32.totalorder %s63, %s64
      %p73 = scmp.eq.s32.totalorder %s18, 0
      %p74 = por %p72, %p73
      %p75 = scmp.ne.s32.totalorder %s63, %s64
      %p76 = scmp.eq.s32.totalorder %s19, 3
      %p77 = por %p75, %p76
      %p79 = scmp.ne.s32.totalorder %s64, %s78
      %p80 = scmp.eq.s32.totalorder %s19, 0
      %p81 = por %p79, %p80
      %s83 = sadd.s32 %s82, 1
      %p86 = scmp.eq.s32.totalorder %s13, 3
      %p87 = scmp.ne.s32.totalorder %s82, %s84
      %p88 = scmp.eq.s32.totalorder %s13, 0
      %p89 = por %p87, %p88
      %p90 = scmp.ne.s32.totalorder %s82, %s84
      %p91 = scmp.eq.s32.totalorder %s18, 3
      %p92 = por %p90, %p91
      %p93 = scmp.ne.s32.totalorder %s84, %s85
      %p94 = scmp.eq.s32.totalorder %s18, 0
      %p95 = por %p93, %p94
      %p96 = scmp.ne.s32.totalorder %s84, %s85
      %p97 = scmp.eq.s32.totalorder %s19, 3
      %p98 = por %p96, %p97
      %p100 = scmp.ne.s32.totalorder %s85, %s99
      %p101 = scmp.eq.s32.totalorder %s19, 0
      %p102 = por %p100, %p101
      %s104 = sadd.s32 %s103, 1
      %p107 = scmp.eq.s32.totalorder %s13, 3
      %p108 = scmp.ne.s32.totalorder %s103, %s105
      %p109 = scmp.eq.s32.totalorder %s13, 0
      %p110 = por %p108, %p109
      %p111 = scmp.ne.s32.totalorder %s103, %s105
      %p112 = scmp.eq.s32.totalorder %s18, 3
      %p113 = por %p111, %p112
      %p114 = scmp.ne.s32.totalorder %s105, %s106
      %p115 = scmp.eq.s32.totalorder %s18, 0
      %p116 = por %p114, %p115
      %p117 = scmp.ne.s32.totalorder %s105, %s106
      %p118 = scmp.eq.s32.totalorder %s19, 3
      %p119 = por %p117, %p118
      %p121 = scmp.ne.s32.totalorder %s106, %s120
      %p122 = scmp.eq.s32.totalorder %s19, 0
      %p123 = por %p121, %p122
      %s124 = ssub.s32 %s20, %s32
      %s125 = ssub.s32 %s21, %s28
      %s126 = sor.u32 %s124, %s125
      %p127 = scmp.eq.s32.totalorder %s126, 0
      %s129 = sadd.s32 %s128, 1
      %s130 = scalar_select %p127, %s128, %s129
      %p133 = pneg %p127
      %p134 = scmp.eq.s32.totalorder %s13, 3
      %p135 = por %p133, %p134
      %p136 = scmp.ne.s32.totalorder %s128, %s131
      %p137 = scmp.eq.s32.totalorder %s13, 0
      %p138 = por %p136, %p137
      %p139 = scmp.ne.s32.totalorder %s128, %s131
      %p140 = scmp.eq.s32.totalorder %s18, 3
      %p141 = por %p139, %p140
      %p142 = scmp.ne.s32.totalorder %s131, %s132
      %p143 = scmp.eq.s32.totalorder %s18, 0
      %p144 = por %p142, %p143
      %p145 = scmp.ne.s32.totalorder %s131, %s132
      %p146 = scmp.eq.s32.totalorder %s19, 3
      %p147 = por %p145, %p146
      %p149 = scmp.ne.s32.totalorder %s132, %s148
      %p150 = scmp.eq.s32.totalorder %s19, 0
      %p151 = por %p149, %p150
      %p152 = scmp.le.s32.totalorder 1, %s13
      %p153 = scmp.lt.s32.totalorder %s13, 5
      %p154 = pnand %p152, %p153
      %p155 = pneg %p154
      // Predicated region
      $region9: #{conv_block_3d.3} parent=5 // pred_check
        _
      $region10: #{conv_block_3d.3} parent=5 // pred_check_branch
        %157 = sbr.rel (%p154) target = $region12
      $region11: #{conv_block_3d.3} parent=5 // pred_region
        %s158 = ssub.s32 %s13, 1
        // Predicated region
        $region13: #{conv_block_3d.3} parent=11 // pred_check
          %p159 = pneg %p74
        $region14: #{conv_block_3d.3} parent=11 // pred_check_branch
          %161 = sbr.rel (%p159) target = $region16
        $region15: #{conv_block_3d.3} parent=11 // pred_region
          _
        $region16: #{conv_block_3d.3} parent=11 // pred_fallthru
          _
        // Predicated region
        $region17: #{conv_block_3d.3} parent=11 // pred_check
          %p162 = pneg %p95
        $region18: #{conv_block_3d.3} parent=11 // pred_check_branch
          %164 = sbr.rel (%p162) target = $region20
        $region19: #{conv_block_3d.3} parent=11 // pred_region
          _
        $region20: #{conv_block_3d.3} parent=11 // pred_fallthru
          _
        // Predicated region
        $region21: #{conv_block_3d.3} parent=11 // pred_check
          %p165 = pneg %p116
        $region22: #{conv_block_3d.3} parent=11 // pred_check_branch
          %167 = sbr.rel (%p165) target = $region24
        $region23: #{conv_block_3d.3} parent=11 // pred_region
          _
        $region24: #{conv_block_3d.3} parent=11 // pred_fallthru
          _
      $region12: #{conv_block_3d.3} parent=5 // pred_fallthru
        _
      %p168 = scmp.lt.s32.totalorder %s13, 4
      // Predicated region
      $region25: #{conv_block_3d.3} parent=5 // pred_check
        %p169 = pneg %p168
      $region26: #{conv_block_3d.3} parent=5 // pred_check_branch
        %171 = sbr.rel (%p169) target = $region28
      $region27: #{conv_block_3d.3} parent=5 // pred_region
        // Predicated region
        $region29: #{conv_block_3d.3} parent=27 // pred_check
          %p172 = pneg %p47
        $region30: #{conv_block_3d.3} parent=27 // pred_check_branch
          %174 = sbr.rel (%p172) target = $region32
        $region31: #{conv_block_3d.3} parent=27 // pred_region
          %s175 = smul.u32 32, %s21
          %p176 = scmp.lt.s32.totalorder %s20, 1
          %s177 = scalar_select %p176, %s20, 1
          %p178 = scmp.lt.s32.totalorder %s175, 63
          %s179 = scalar_select %p178, %s175, 63
          %s180 = smul.addr %s179, 2
          %s181 = smul.addr %s177, 128
          %s182 = sadd.s32 %s180, %s181
          %s183 = smul.addr %s182, 4
          %s184 = scalar_lea.vmem %s0, %s183
          %s185 = smul.u32 32, %s21
        $region32: #{conv_block_3d.3} parent=27 // pred_fallthru
          _
      $region28: #{conv_block_3d.3} parent=5 // pred_fallthru
        _
      %p186 = scmp.le.s32.totalorder 1, %s13
      %p187 = scmp.lt.s32.totalorder %s13, 5
      %p188 = pnand %p186, %p187
      %p189 = pneg %p188
      // Predicated region
      $region33: #{conv_block_3d.3} parent=5 // pred_check
        _
      $region34: #{conv_block_3d.3} parent=5 // pred_check_branch
        %191 = sbr.rel (%p188) target = $region36
      $region35: #{conv_block_3d.3} parent=5 // pred_region
        %s192 = ssub.s32 %s13, 1
        %s193 = smul.u32 32, %s23
        %p194 = scmp.lt.s32.totalorder %s22, 1
        %s195 = scalar_select %p194, %s22, 1
        %p196 = scmp.lt.s32.totalorder %s193, 63
        %s197 = scalar_select %p196, %s193, 63
        %s198 = smul.addr %s197, 2
        %s199 = smul.addr %s195, 128
        %s200 = sadd.s32 %s198, %s199
        %s201 = smul.addr %s200, 4
        %s202 = scalar_lea.vmem %s0, %s201
        %p203 = pneg %p53
        %p204 = pneg %p50
        %p205 = pneg %p74
        %p206 = pneg %p71
        %p207 = pneg %p95
        %p208 = pneg %p92
        %p209 = pneg %p116
        %p210 = pneg %p113
        %p211 = pneg %p144
        %p212 = pneg %p141
        %s213 = sand.u32 %s131, 1
        %s214 = scalar_lea.sflag [#allocation3], %s213
        %s215 = sand.u32 %s131, 1
        %s216 = smul.addr %s215, 256
        %s217 = scalar_lea.vmem [#allocation2], %s216
        %s218 = smul.u32 32, %s23
        %p219 = scmp.lt.s32.totalorder %s22, 1
        %s220 = scalar_select %p219, %s22, 1
        %p221 = scmp.lt.s32.totalorder %s218, 63
        %s222 = scalar_select %p221, %s218, 63
        %s223 = smul.addr %s222, 2
        %s224 = smul.addr %s220, 128
        %s225 = sadd.s32 %s223, %s224
        %s226 = smul.addr %s225, 4
        %s227 = scalar_lea.vmem %s0, %s226
        %s228 = smul.u32 32, %s23
        %s229 = smul.u32 32, %s23
        %v231 = vld [vmem:[%s227] sm:$0xff]
        %v232 = vld [vmem:[%s227 + $0x8] sm:$0xff]
        %v233 = vld [vmem:[%s227 + $0x10] sm:$0xff]
        %v234 = vld [vmem:[%s227 + $0x18] sm:$0xff]
        %v235 = vld [vmem:[%s227 + $0x20] sm:$0xff]
        %v236 = vld [vmem:[%s227 + $0x28] sm:$0xff]
        %v237 = vld [vmem:[%s227 + $0x30] sm:$0xff]
        %v238 = vld [vmem:[%s227 + $0x38] sm:$0xff]
        %v239 = vld [vmem:[%s227 + $0x40] sm:$0xff]
        %v240 = vld [vmem:[%s227 + $0x48] sm:$0xff]
        %v241 = vld [vmem:[%s227 + $0x50] sm:$0xff]
        %v242 = vld [vmem:[%s227 + $0x58] sm:$0xff]
        %v243 = vld [vmem:[%s227 + $0x60] sm:$0xff]
        %v244 = vld [vmem:[%s227 + $0x68] sm:$0xff]
        %v245 = vld [vmem:[%s227 + $0x70] sm:$0xff]
        %v246 = vld [vmem:[%s227 + $0x78] sm:$0xff]
        %v247 = vld [vmem:[%s227 + $0x80] sm:$0xff]
        %v248 = vld [vmem:[%s227 + $0x88] sm:$0xff]
        %v249 = vld [vmem:[%s227 + $0x90] sm:$0xff]
        %v250 = vld [vmem:[%s227 + $0x98] sm:$0xff]
        %v251 = vld [vmem:[%s227 + $0xa0] sm:$0xff]
        %v252 = vld [vmem:[%s227 + $0xa8] sm:$0xff]
        %v253 = vld [vmem:[%s227 + $0xb0] sm:$0xff]
        %v254 = vld [vmem:[%s227 + $0xb8] sm:$0xff]
        %v255 = vld [vmem:[%s227 + $0xc0] sm:$0xff]
        %v256 = vld [vmem:[%s227 + $0xc8] sm:$0xff]
        %v257 = vld [vmem:[%s227 + $0xd0] sm:$0xff]
        %v258 = vld [vmem:[%s227 + $0xd8] sm:$0xff]
        %v259 = vld [vmem:[%s227 + $0xe0] sm:$0xff]
        %v260 = vld [vmem:[%s227 + $0xe8] sm:$0xff]
        %v261 = vld [vmem:[%s227 + $0xf0] sm:$0xff]
        %v262 = vld [vmem:[%s227 + $0xf8] sm:$0xff]
        %v263 = vld [vmem:[%s1] sm:$0xf]
        %v264 = vld [vmem:[%s1 + $0x4] sm:$0xf]
        %v265 = vld [vmem:[%s1 + $0x8] sm:$0xf]
        %v266 = vld [vmem:[%s1 + $0xc] sm:$0xf]
        %v267 = vld [vmem:[%s1 + $0x10] sm:$0xf]
        %v268 = vld [vmem:[%s1 + $0x14] sm:$0xf]
        %v269 = vld [vmem:[%s1 + $0x18] sm:$0xf]
        %v270 = vld [vmem:[%s1 + $0x1c] sm:$0xf]
        %v271 = vld [vmem:[%s1 + $0x20] sm:$0xf]
        %v272 = vld [vmem:[%s1 + $0x24] sm:$0xf]
        %v273 = vld [vmem:[%s1 + $0x28] sm:$0xf]
        %v274 = vld [vmem:[%s1 + $0x2c] sm:$0xf]
        %v275 = vld [vmem:[%s1 + $0x30] sm:$0xf]
        %v276 = vld [vmem:[%s1 + $0x34] sm:$0xf]
        %v277 = vld [vmem:[%s1 + $0x38] sm:$0xf]
        %v278 = vld [vmem:[%s1 + $0x3c] sm:$0xf]
        %v279 = vld [vmem:[%s1 + $0x40] sm:$0xf]
        %v280 = vld [vmem:[%s1 + $0x44] sm:$0xf]
        %v281 = vld [vmem:[%s1 + $0x48] sm:$0xf]
        %v282 = vld [vmem:[%s1 + $0x4c] sm:$0xf]
        %v283 = vld [vmem:[%s1 + $0x50] sm:$0xf]
        %v284 = vld [vmem:[%s1 + $0x54] sm:$0xf]
        %v285 = vld [vmem:[%s1 + $0x58] sm:$0xf]
        %v286 = vld [vmem:[%s1 + $0x5c] sm:$0xf]
        %v287 = vld [vmem:[%s1 + $0x60] sm:$0xf]
        %v288 = vld [vmem:[%s1 + $0x64] sm:$0xf]
        %v289 = vld [vmem:[%s1 + $0x68] sm:$0xf]
        %v322 = vunpack.c.l.b16 %v231
        %v323 = vunpack.c.h.b16 %v231
        %v324 = vunpack.c.l.b16 %v232
        %v325 = vunpack.c.h.b16 %v232
        %v326 = vunpack.c.l.b16 %v233
        %v327 = vunpack.c.h.b16 %v233
        %v328 = vunpack.c.l.b16 %v234
        %v329 = vunpack.c.h.b16 %v234
        %v330 = vunpack.c.l.b16 %v235
        %v331 = vunpack.c.h.b16 %v235
        %v332 = vunpack.c.l.b16 %v236
        %v333 = vunpack.c.h.b16 %v236
        %v334 = vunpack.c.l.b16 %v237
        %v335 = vunpack.c.h.b16 %v237
        %v336 = vunpack.c.l.b16 %v238
        %v337 = vunpack.c.h.b16 %v238
        %v338 = vunpack.c.l.b16 %v239
        %v339 = vunpack.c.h.b16 %v239
        %v340 = vunpack.c.l.b16 %v240
        %v341 = vunpack.c.h.b16 %v240
        %v342 = vunpack.c.l.b16 %v241
        %v343 = vunpack.c.h.b16 %v241
        %v344 = vunpack.c.l.b16 %v242
        %v345 = vunpack.c.h.b16 %v242
        %v346 = vunpack.c.l.b16 %v243
        %v347 = vunpack.c.h.b16 %v243
        %v348 = vunpack.c.l.b16 %v244
        %v349 = vunpack.c.h.b16 %v244
        %v350 = vunpack.c.l.b16 %v245
        %v351 = vunpack.c.h.b16 %v245
        %v352 = vunpack.c.l.b16 %v246
        %v353 = vunpack.c.h.b16 %v246
        %v354 = vunpack.c.l.b16 %v247
        %v355 = vunpack.c.h.b16 %v247
        %v356 = vunpack.c.l.b16 %v248
        %v357 = vunpack.c.h.b16 %v248
        %v358 = vunpack.c.l.b16 %v249
        %v359 = vunpack.c.h.b16 %v249
        %v360 = vunpack.c.l.b16 %v250
        %v361 = vunpack.c.h.b16 %v250
        %v362 = vunpack.c.l.b16 %v251
        %v363 = vunpack.c.h.b16 %v251
        %v364 = vunpack.c.l.b16 %v252
        %v365 = vunpack.c.h.b16 %v252
        %v366 = vunpack.c.l.b16 %v253
        %v367 = vunpack.c.h.b16 %v253
        %v368 = vunpack.c.l.b16 %v254
        %v369 = vunpack.c.h.b16 %v254
        %v370 = vunpack.c.l.b16 %v255
        %v371 = vunpack.c.h.b16 %v255
        %v372 = vunpack.c.l.b16 %v256
        %v373 = vunpack.c.h.b16 %v256
        %v374 = vunpack.c.l.b16 %v257
        %v375 = vunpack.c.h.b16 %v257
        %v376 = vunpack.c.l.b16 %v258
        %v377 = vunpack.c.h.b16 %v258
        %v378 = vunpack.c.l.b16 %v259
        %v379 = vunpack.c.h.b16 %v259
        %v380 = vunpack.c.l.b16 %v260
        %v381 = vunpack.c.h.b16 %v260
        %v382 = vunpack.c.l.b16 %v261
        %v383 = vunpack.c.h.b16 %v261
        %v384 = vunpack.c.l.b16 %v262
        %v385 = vunpack.c.h.b16 %v262
        %v386 = vpack.c.b16 %v324, %v322
        %v387 = vpack.c.b16 %v325, %v323
        %v388 = vpack.c.b16 %v328, %v326
        %v389 = vpack.c.b16 %v329, %v327
        %v390 = vpack.c.b16 %v332, %v330
        %v391 = vpack.c.b16 %v333, %v331
        %v392 = vpack.c.b16 %v336, %v334
        %v393 = vpack.c.b16 %v337, %v335
        %v394 = vpack.c.b16 %v340, %v338
        %v395 = vpack.c.b16 %v341, %v339
        %v396 = vpack.c.b16 %v344, %v342
        %v397 = vpack.c.b16 %v345, %v343
        %v398 = vpack.c.b16 %v348, %v346
        %v399 = vpack.c.b16 %v349, %v347
        %v400 = vpack.c.b16 %v352, %v350
        %v401 = vpack.c.b16 %v353, %v351
        %v402 = vpack.c.b16 %v356, %v354
        %v403 = vpack.c.b16 %v357, %v355
        %v404 = vpack.c.b16 %v360, %v358
        %v405 = vpack.c.b16 %v361, %v359
        %v406 = vpack.c.b16 %v364, %v362
        %v407 = vpack.c.b16 %v365, %v363
        %v408 = vpack.c.b16 %v368, %v366
        %v409 = vpack.c.b16 %v369, %v367
        %v410 = vpack.c.b16 %v372, %v370
        %v411 = vpack.c.b16 %v373, %v371
        %v412 = vpack.c.b16 %v376, %v374
        %v413 = vpack.c.b16 %v377, %v375
        %v414 = vpack.c.b16 %v380, %v378
        %v415 = vpack.c.b16 %v381, %v379
        %v416 = vpack.c.b16 %v384, %v382
        %v417 = vpack.c.b16 %v385, %v383
        %v461 = vunpack.c.l.b16 %v263
        %v462 = vunpack.c.l.b16 %v264
        %v463 = vunpack.c.l.b16 %v265
        %v464 = vunpack.c.l.b16 %v266
        %v465 = vunpack.c.l.b16 %v267
        %v466 = vunpack.c.l.b16 %v268
        %v467 = vunpack.c.l.b16 %v269
        %v468 = vunpack.c.l.b16 %v270
        %v469 = vunpack.c.l.b16 %v271
        %v470 = vunpack.c.l.b16 %v272
        %v471 = vunpack.c.l.b16 %v273
        %v472 = vunpack.c.l.b16 %v274
        %v473 = vunpack.c.l.b16 %v275
        %v474 = vunpack.c.l.b16 %v276
        %v475 = vunpack.c.l.b16 %v277
        %v476 = vunpack.c.l.b16 %v278
        %v477 = vunpack.c.l.b16 %v279
        %v478 = vunpack.c.l.b16 %v280
        %v479 = vunpack.c.l.b16 %v281
        %v480 = vunpack.c.l.b16 %v282
        %v481 = vunpack.c.l.b16 %v283
        %v482 = vunpack.c.l.b16 %v284
        %v483 = vunpack.c.l.b16 %v285
        %v484 = vunpack.c.l.b16 %v286
        %v485 = vunpack.c.l.b16 %v287
        %v486 = vunpack.c.l.b16 %v288
        %v487 = vunpack.c.l.b16 %v289
        %v488 = vpack.c.b16 %v462, %v461
        %v489 = vpack.c.b16 %v464, %v463
        %v490 = vpack.c.b16 %v466, %v465
        %v491 = vpack.c.b16 %v468, %v467
        %v492 = vpack.c.b16 %v470, %v469
        %v493 = vpack.c.b16 %v472, %v471
        %v494 = vpack.c.b16 %v474, %v473
        %v495 = vpack.c.b16 %v476, %v475
        %v496 = vpack.c.b16 %v478, %v477
        %v497 = vpack.c.b16 %v480, %v479
        %v498 = vpack.c.b16 %v482, %v481
        %v499 = vpack.c.b16 %v484, %v483
        %v500 = vpack.c.b16 %v486, %v485
        %v501 = vpack.c.b16 %v487, %v487
        %vm515 = vcmask 719872
        %v517 = vsel %vm515, %v387, 0
        %v520 = vsel %vm515, %v389, 0
        %v523 = vsel %vm515, %v391, 0
        %v526 = vsel %vm515, %v393, 0
        %v529 = vsel %vm515, %v395, 0
        %v532 = vsel %vm515, %v397, 0
        %v535 = vsel %vm515, %v399, 0
        %v538 = vsel %vm515, %v401, 0
        %v541 = vsel %vm515, %v403, 0
        %v544 = vsel %vm515, %v405, 0
        %v547 = vsel %vm515, %v407, 0
        %v550 = vsel %vm515, %v409, 0
        %v553 = vsel %vm515, %v411, 0
        %v556 = vsel %vm515, %v413, 0
        %v559 = vsel %vm515, %v415, 0
        %v562 = vsel %vm515, %v417, 0
        %vm564 = vcmask 1043456
        %v566 = vsel %vm564, %v501, 0
        %568 = vmatprep.subr.bf16.mxu0 0
        %569 = vmatpush1.bf16.msra.mxu0 %v488
        %570 = vmatprep.subr.bf16.mxu0 0
        %571 = vmatpush1.bf16.msra.mxu0 %v489
        %572 = vmatprep.subr.bf16.mxu0 0
        %573 = vmatpush1.bf16.msra.mxu0 %v490
        %574 = vmatprep.subr.bf16.mxu0 0
        %575 = vmatpush1.bf16.msra.mxu0 %v491
        %576 = vmatprep.subr.bf16.mxu0 0
        %577 = vmatpush1.bf16.msra.mxu0 %v492
        %578 = vmatprep.subr.bf16.mxu0 0
        %579 = vmatpush1.bf16.msra.mxu0 %v493
        %580 = vmatprep.subr.bf16.mxu0 0
        %581 = vmatpush1.bf16.msra.mxu0 %v494
        %582 = vmatprep.subr.bf16.mxu0 0
        %583 = vmatpush1.bf16.msra.mxu0 %v495
        %584 = vmatprep.subr.bf16.mxu0 0
        %585 = vmatpush1.bf16.msra.mxu0 %v496
        %586 = vmatprep.subr.bf16.mxu0 0
        %587 = vmatpush1.bf16.msra.mxu0 %v497
        %588 = vmatprep.subr.bf16.mxu0 0
        %589 = vmatpush1.bf16.msra.mxu0 %v498
        %590 = vmatprep.subr.bf16.mxu0 0
        %591 = vmatpush1.bf16.msra.mxu0 %v499
        %592 = vmatprep.subr.bf16.mxu0 0
        %593 = vmatpush1.bf16.msra.mxu0 %v500
        %594 = vmatprep.subr.bf16.mxu0 0
        %595 = vmatpush1.bf16.msra.mxu0 %v566
        %596 = vmatprep.subr.bf16.mxu0 0
        %597 = vmatpush1.bf16.msra.mxu0 0
        %598 = vmatprep.subr.bf16.mxu0 0
        %599 = vmatpush1.bf16.msra.mxu0 0
        %600 = vmatprep.mubr.bf16.mxu0 %v517
        %601 = vmatmul.mubr.bf16.gmra.mrb[0].mxu0 %v386
        %v602 = vpop.f32.mrb[0].mxu0
        %v603 = vadd.f32 0.0, %v602
        %v604 = vpop.f32.mrb[0].mxu0
        %v605 = vpop.f32.mrb[0].mxu0
        %v606 = vadd.f32 0.0, %v605
        %v607 = vpop.f32.mrb[0].mxu0
        %608 = vmatprep.mubr.bf16.mxu0 %v520
        %609 = vmatmul.mubr.bf16.gmra.mrb[0].mxu0 %v388
        %v610 = vpop.f32.mrb[0].mxu0
        %v611 = vadd.f32 0.0, %v610
        %v612 = vpop.f32.mrb[0].mxu0
        %v613 = vpop.f32.mrb[0].mxu0
        %v614 = vadd.f32 0.0, %v613
        %v615 = vpop.f32.mrb[0].mxu0
        %616 = vmatprep.mubr.bf16.mxu0 %v523
        %617 = vmatmul.mubr.bf16.gmra.mrb[0].mxu0 %v390
        %v618 = vpop.f32.mrb[0].mxu0
        %v619 = vadd.f32 0.0, %v618
        %v620 = vpop.f32.mrb[0].mxu0
        %v621 = vpop.f32.mrb[0].mxu0
        %v622 = vadd.f32 0.0, %v621
        %v623 = vpop.f32.mrb[0].mxu0
        %624 = vmatprep.mubr.bf16.mxu0 %v526
        %625 = vmatmul.mubr.bf16.gmra.mrb[0].mxu0 %v392
        %v626 = vpop.f32.mrb[0].mxu0
        %v627 = vadd.f32 0.0, %v626
        %v628 = vpop.f32.mrb[0].mxu0
        %v629 = vpop.f32.mrb[0].mxu0
        %v630 = vadd.f32 0.0, %v629
        %v631 = vpop.f32.mrb[0].mxu0
        %632 = vmatprep.mubr.bf16.mxu0 %v529
        %633 = vmatmul.mubr.bf16.gmra.mrb[0].mxu0 %v394
        %v634 = vpop.f32.mrb[0].mxu0
        %v635 = vadd.f32 0.0, %v634
        %v636 = vpop.f32.mrb[0].mxu0
        %v637 = vpop.f32.mrb[0].mxu0
        %v638 = vadd.f32 0.0, %v637
        %v639 = vpop.f32.mrb[0].mxu0
        %640 = vmatprep.mubr.bf16.mxu0 %v532
        %641 = vmatmul.mubr.bf16.gmra.mrb[0].mxu0 %v396
        %v642 = vpop.f32.mrb[0].mxu0
        %v643 = vadd.f32 0.0, %v642
        %v644 = vpop.f32.mrb[0].mxu0
        %v645 = vpop.f32.mrb[0].mxu0
        %v646 = vadd.f32 0.0, %v645
        %v647 = vpop.f32.mrb[0].mxu0
        %648 = vmatprep.mubr.bf16.mxu0 %v535
        %649 = vmatmul.mubr.bf16.gmra.mrb[0].mxu0 %v398
        %v650 = vpop.f32.mrb[0].mxu0
        %v651 = vadd.f32 0.0, %v650
        %v652 = vpop.f32.mrb[0].mxu0
        %v653 = vpop.f32.mrb[0].mxu0
        %v654 = vadd.f32 0.0, %v653
        %v655 = vpop.f32.mrb[0].mxu0
        %656 = vmatprep.mubr.bf16.mxu0 %v538
        %657 = vmatmul.mubr.bf16.gmra.mrb[0].mxu0 %v400
        %v658 = vpop.f32.mrb[0].mxu0
        %v659 = vadd.f32 0.0, %v658
        %v660 = vpop.f32.mrb[0].mxu0
        %v661 = vpop.f32.mrb[0].mxu0
        %v662 = vadd.f32 0.0, %v661
        %v663 = vpop.f32.mrb[0].mxu0
        %664 = vmatprep.mubr.bf16.mxu0 %v541
        %665 = vmatmul.mubr.bf16.gmra.mrb[0].mxu0 %v402
        %v666 = vpop.f32.mrb[0].mxu0
        %v667 = vadd.f32 0.0, %v666
        %v668 = vpop.f32.mrb[0].mxu0
        %v669 = vpop.f32.mrb[0].mxu0
        %v670 = vadd.f32 0.0, %v669
        %v671 = vpop.f32.mrb[0].mxu0
        %672 = vmatprep.mubr.bf16.mxu0 %v544
        %673 = vmatmul.mubr.bf16.gmra.mrb[0].mxu0 %v404
        %v674 = vpop.f32.mrb[0].mxu0
        %v675 = vadd.f32 0.0, %v674
        %v676 = vpop.f32.mrb[0].mxu0
        %v677 = vpop.f32.mrb[0].mxu0
        %v678 = vadd.f32 0.0, %v677
        %v679 = vpop.f32.mrb[0].mxu0
        %680 = vmatprep.mubr.bf16.mxu0 %v547
        %681 = vmatmul.mubr.bf16.gmra.mrb[0].mxu0 %v406
        %v682 = vpop.f32.mrb[0].mxu0
        %v683 = vadd.f32 0.0, %v682
        %v684 = vpop.f32.mrb[0].mxu0
        %v685 = vpop.f32.mrb[0].mxu0
        %v686 = vadd.f32 0.0, %v685
        %v687 = vpop.f32.mrb[0].mxu0
        %688 = vmatprep.mubr.bf16.mxu0 %v550
        %689 = vmatmul.mubr.bf16.gmra.mrb[0].mxu0 %v408
        %v690 = vpop.f32.mrb[0].mxu0
        %v691 = vadd.f32 0.0, %v690
        %v692 = vpop.f32.mrb[0].mxu0
        %v693 = vpop.f32.mrb[0].mxu0
        %v694 = vadd.f32 0.0, %v693
        %v695 = vpop.f32.mrb[0].mxu0
        %696 = vmatprep.mubr.bf16.mxu0 %v553
        %697 = vmatmul.mubr.bf16.gmra.mrb[0].mxu0 %v410
        %v698 = vpop.f32.mrb[0].mxu0
        %v699 = vadd.f32 0.0, %v698
        %v700 = vpop.f32.mrb[0].mxu0
        %v701 = vpop.f32.mrb[0].mxu0
        %v702 = vadd.f32 0.0, %v701
        %v703 = vpop.f32.mrb[0].mxu0
        %704 = vmatprep.mubr.bf16.mxu0 %v556
        %705 = vmatmul.mubr.bf16.gmra.mrb[0].mxu0 %v412
        %v706 = vpop.f32.mrb[0].mxu0
        %v707 = vadd.f32 0.0, %v706
        %v708 = vpop.f32.mrb[0].mxu0
        %v709 = vpop.f32.mrb[0].mxu0
        %v710 = vadd.f32 0.0, %v709
        %v711 = vpop.f32.mrb[0].mxu0
        %712 = vmatprep.mubr.bf16.mxu0 %v559
        %713 = vmatmul.mubr.bf16.gmra.mrb[0].mxu0 %v414
        %v714 = vpop.f32.mrb[0].mxu0
        %v715 = vadd.f32 0.0, %v714
        %v716 = vpop.f32.mrb[0].mxu0
        %v717 = vpop.f32.mrb[0].mxu0
        %v718 = vadd.f32 0.0, %v717
        %v719 = vpop.f32.mrb[0].mxu0
        %720 = vmatprep.mubr.bf16.mxu0 %v562
        %721 = vmatmul.mubr.bf16.gmra.mrb[0].mxu0 %v416
        %v722 = vpop.f32.mrb[0].mxu0
        %v723 = vadd.f32 0.0, %v722
        %v724 = vpop.f32.mrb[0].mxu0
        %v725 = vpop.f32.mrb[0].mxu0
        %v726 = vadd.f32 0.0, %v725
        %v727 = vpop.f32.mrb[0].mxu0
        %728 = vdwg.mxu0
        %v729 = vld [vmem:[%s2] sm:$0x1]
        %v731 = vlaneseq
        %v732 = vshrl.u32 %v731, 7
        %v733 = vsub.s32 0, %v732
        %v734 = vrot.slane %v729, %v733
        %v736 = vmul.f32 %v603, %v734
        %v737 = vmul.f32 %v606, %v734
        %v738 = vmul.f32 %v611, %v734
        %v739 = vmul.f32 %v614, %v734
        %v740 = vmul.f32 %v619, %v734
        %v741 = vmul.f32 %v622, %v734
        %v742 = vmul.f32 %v627, %v734
        %v743 = vmul.f32 %v630, %v734
        %v744 = vmul.f32 %v635, %v734
        %v745 = vmul.f32 %v638, %v734
        %v746 = vmul.f32 %v643, %v734
        %v747 = vmul.f32 %v646, %v734
        %v748 = vmul.f32 %v651, %v734
        %v749 = vmul.f32 %v654, %v734
        %v750 = vmul.f32 %v659, %v734
        %v751 = vmul.f32 %v662, %v734
        %v752 = vmul.f32 %v667, %v734
        %v753 = vmul.f32 %v670, %v734
        %v754 = vmul.f32 %v675, %v734
        %v755 = vmul.f32 %v678, %v734
        %v756 = vmul.f32 %v683, %v734
        %v757 = vmul.f32 %v686, %v734
        %v758 = vmul.f32 %v691, %v734
        %v759 = vmul.f32 %v694, %v734
        %v760 = vmul.f32 %v699, %v734
        %v761 = vmul.f32 %v702, %v734
        %v762 = vmul.f32 %v707, %v734
        %v763 = vmul.f32 %v710, %v734
        %v764 = vmul.f32 %v715, %v734
        %v765 = vmul.f32 %v718, %v734
        %v766 = vmul.f32 %v723, %v734
        %v767 = vmul.f32 %v726, %v734
        %v768 = vld [vmem:[%s3] sm:$0x1]
        %v770 = vlaneseq
        %v771 = vshrl.u32 %v770, 7
        %v772 = vsub.s32 0, %v771
        %v773 = vrot.slane %v768, %v772
        %v775 = vadd.f32 %v736, %v773
        %v776 = vadd.f32 %v737, %v773
        %v777 = vadd.f32 %v738, %v773
        %v778 = vadd.f32 %v739, %v773
        %v779 = vadd.f32 %v740, %v773
        %v780 = vadd.f32 %v741, %v773
        %v781 = vadd.f32 %v742, %v773
        %v782 = vadd.f32 %v743, %v773
        %v783 = vadd.f32 %v744, %v773
        %v784 = vadd.f32 %v745, %v773
        %v785 = vadd.f32 %v746, %v773
        %v786 = vadd.f32 %v747, %v773
        %v787 = vadd.f32 %v748, %v773
        %v788 = vadd.f32 %v749, %v773
        %v789 = vadd.f32 %v750, %v773
        %v790 = vadd.f32 %v751, %v773
        %v791 = vadd.f32 %v752, %v773
        %v792 = vadd.f32 %v753, %v773
        %v793 = vadd.f32 %v754, %v773
        %v794 = vadd.f32 %v755, %v773
        %v795 = vadd.f32 %v756, %v773
        %v796 = vadd.f32 %v757, %v773
        %v797 = vadd.f32 %v758, %v773
        %v798 = vadd.f32 %v759, %v773
        %v799 = vadd.f32 %v760, %v773
        %v800 = vadd.f32 %v761, %v773
        %v801 = vadd.f32 %v762, %v773
        %v802 = vadd.f32 %v763, %v773
        %v803 = vadd.f32 %v764, %v773
        %v804 = vadd.f32 %v765, %v773
        %v805 = vadd.f32 %v766, %v773
        %v806 = vadd.f32 %v767, %v773
        %v807 = vmax.f32 %v775, 0.0
        %v808 = vmax.f32 %v776, 0.0
        %v809 = vmax.f32 %v777, 0.0
        %v810 = vmax.f32 %v778, 0.0
        %v811 = vmax.f32 %v779, 0.0
        %v812 = vmax.f32 %v780, 0.0
        %v813 = vmax.f32 %v781, 0.0
        %v814 = vmax.f32 %v782, 0.0
        %v815 = vmax.f32 %v783, 0.0
        %v816 = vmax.f32 %v784, 0.0
        %v817 = vmax.f32 %v785, 0.0
        %v818 = vmax.f32 %v786, 0.0
        %v819 = vmax.f32 %v787, 0.0
        %v820 = vmax.f32 %v788, 0.0
        %v821 = vmax.f32 %v789, 0.0
        %v822 = vmax.f32 %v790, 0.0
        %v823 = vmax.f32 %v791, 0.0
        %v824 = vmax.f32 %v792, 0.0
        %v825 = vmax.f32 %v793, 0.0
        %v826 = vmax.f32 %v794, 0.0
        %v827 = vmax.f32 %v795, 0.0
        %v828 = vmax.f32 %v796, 0.0
        %v829 = vmax.f32 %v797, 0.0
        %v830 = vmax.f32 %v798, 0.0
        %v831 = vmax.f32 %v799, 0.0
        %v832 = vmax.f32 %v800, 0.0
        %v833 = vmax.f32 %v801, 0.0
        %v834 = vmax.f32 %v802, 0.0
        %v835 = vmax.f32 %v803, 0.0
        %v836 = vmax.f32 %v804, 0.0
        %v837 = vmax.f32 %v805, 0.0
        %v838 = vmax.f32 %v806, 0.0
        %839 = vst [vmem:[%s217] sm:$0xff] %v807
        %840 = vst [vmem:[%s217 + $0x8] sm:$0xff] %v808
        %841 = vst [vmem:[%s217 + $0x10] sm:$0xff] %v809
        %842 = vst [vmem:[%s217 + $0x18] sm:$0xff] %v810
        %843 = vst [vmem:[%s217 + $0x20] sm:$0xff] %v811
        %844 = vst [vmem:[%s217 + $0x28] sm:$0xff] %v812
        %845 = vst [vmem:[%s217 + $0x30] sm:$0xff] %v813
        %846 = vst [vmem:[%s217 + $0x38] sm:$0xff] %v814
        %847 = vst [vmem:[%s217 + $0x40] sm:$0xff] %v815
        %848 = vst [vmem:[%s217 + $0x48] sm:$0xff] %v816
        %849 = vst [vmem:[%s217 + $0x50] sm:$0xff] %v817
        %850 = vst [vmem:[%s217 + $0x58] sm:$0xff] %v818
        %851 = vst [vmem:[%s217 + $0x60] sm:$0xff] %v819
        %852 = vst [vmem:[%s217 + $0x68] sm:$0xff] %v820
        %853 = vst [vmem:[%s217 + $0x70] sm:$0xff] %v821
        %854 = vst [vmem:[%s217 + $0x78] sm:$0xff] %v822
        %855 = vst [vmem:[%s217 + $0x80] sm:$0xff] %v823
        %856 = vst [vmem:[%s217 + $0x88] sm:$0xff] %v824
        %857 = vst [vmem:[%s217 + $0x90] sm:$0xff] %v825
        %858 = vst [vmem:[%s217 + $0x98] sm:$0xff] %v826
        %859 = vst [vmem:[%s217 + $0xa0] sm:$0xff] %v827
        %860 = vst [vmem:[%s217 + $0xa8] sm:$0xff] %v828
        %861 = vst [vmem:[%s217 + $0xb0] sm:$0xff] %v829
        %862 = vst [vmem:[%s217 + $0xb8] sm:$0xff] %v830
        %863 = vst [vmem:[%s217 + $0xc0] sm:$0xff] %v831
        %864 = vst [vmem:[%s217 + $0xc8] sm:$0xff] %v832
        %865 = vst [vmem:[%s217 + $0xd0] sm:$0xff] %v833
        %866 = vst [vmem:[%s217 + $0xd8] sm:$0xff] %v834
        %867 = vst [vmem:[%s217 + $0xe0] sm:$0xff] %v835
        %868 = vst [vmem:[%s217 + $0xe8] sm:$0xff] %v836
        %869 = vst [vmem:[%s217 + $0xf0] sm:$0xff] %v837
        %870 = vst [vmem:[%s217 + $0xf8] sm:$0xff] %v838
        %s871 = sand.u32 %s131, 1
        %s872 = scalar_lea.sflag [#allocation3], %s871
        %s873 = sand.u32 %s131, 1
        %s874 = smul.addr %s873, 256
        %s875 = scalar_lea.vmem [#allocation2], %s874
        // Predicated region
        $region37: #{conv_block_3d.3} parent=35 // pred_check
          %p876 = pneg %p141
        $region38: #{conv_block_3d.3} parent=35 // pred_check_branch
          %878 = sbr.rel (%p876) target = $region40
        $region39: #{conv_block_3d.3} parent=35 // pred_region
          %s879 = smul.u32 32, %s23
          %s881 = ssub.s32 4096, 4096
          %882 = vsyncadd %s872, %s881
          %s883 = smul.addr %s22, 64
          %s884 = sadd.s32 %s879, %s883
          %s885 = smul.addr %s884, 128
          %s886 = scalar_lea.hbm %s4, %s885
          %s887 = sshll.u32 %s875, 4
          %s888 = int_to_ptr.vmem [resolvable:$true] %s887
          %893 = dma.vmem_to_hbm [thread:$0]  %s888, 4096, %s886, %s872, 128, 128, 8
        $region40: #{conv_block_3d.3} parent=35 // pred_fallthru
          _
      $region36: #{conv_block_3d.3} parent=5 // pred_fallthru
        _
      %p894 = scmp.le.s32.totalorder 2, %s13
      // Predicated region
      $region41: #{conv_block_3d.3} parent=5 // pred_check
        %p895 = pneg %p894
      $region42: #{conv_block_3d.3} parent=5 // pred_check_branch
        %897 = sbr.rel (%p895) target = $region44
      $region43: #{conv_block_3d.3} parent=5 // pred_region
        %s898 = ssub.s32 %s13, 2
        // Predicated region
        $region45: #{conv_block_3d.3} parent=43 // pred_check
          %p899 = pneg %p147
        $region46: #{conv_block_3d.3} parent=43 // pred_check_branch
          %901 = sbr.rel (%p899) target = $region48
        $region47: #{conv_block_3d.3} parent=43 // pred_region
          %s902 = sand.u32 %s132, 1
          %s903 = scalar_lea.sflag [#allocation3], %s902
          %s904 = sand.u32 %s132, 1
          %s905 = smul.addr %s904, 256
          %s906 = scalar_lea.vmem [#allocation2], %s905
          %907 = dma.done %s903, 4096
        $region48: #{conv_block_3d.3} parent=43 // pred_fallthru
          _
      $region44: #{conv_block_3d.3} parent=5 // pred_fallthru
        _
    $region6: #{conv_block_3d.3} parent=1 // loop_footer
      %s17 = sadd.s32 1, %s13
    $region7: #{conv_block_3d.3} parent=1 // loop_footer_branch
      %12 = sbr.rel target = $region3
    $region8: #{conv_block_3d.3} parent=1 // loop_exit
      _
    %908 = vsyncpa [#allocation3], 1
    %s909 = scalar_lea.sflag [#allocation3], 1
    %910 = vsyncpa %s909, 1

</llo_original>
